<compile_context>
chip_gen: v7x
topology: tpu7x:2x2x1
jax: 0.10.0
libtpu: 0.0.40
codegen_flags: <defaults>
</compile_context>

<pallas_src>
import functools

import jax
import jax.numpy as jnp
import numpy as np
from jax import lax
from jax.experimental import pallas as pl
from jax.experimental.pallas import tpu as pltpu

LN_EPS = 1e-6


# ---------------------------------------------------------------------------
# Shared block_1 body: LayerNorm2d -> fused 1x1 expand -> depthwise 3x3 ->
# SimpleGate.  Returns the gate activation g of shape (dw_ch // 2, S) in f32.
# ---------------------------------------------------------------------------
def _block1_gate(S, W, n_tiles, cd, x, halo, lnw, lnb, w1, b1, wdw, bdw):
    # x: (Cin, S) f32 main tile; halo: (Cin, 2W) f32 = [row above | row below].
    L = S + 2 * W
    x_ext = jnp.concatenate([halo[:, :W], x, halo[:, W:]], axis=1)  # (Cin, L)

    # LayerNorm2d: normalize over channels (sublanes) at every pixel; stats
    # kept in f32 on the VPU/XLU (not offloaded to the MXU) for precision.
    mu = jnp.mean(x_ext, axis=0, keepdims=True)
    xc = x_ext - mu
    var = jnp.mean(xc * xc, axis=0, keepdims=True)
    xn = xc * lax.rsqrt(var + LN_EPS) * lnw + lnb

    # Fused 1x1 expand conv: one (dw_ch, Cin) @ (Cin, L) MXU matmul.
    h = jnp.dot(w1, xn.astype(cd), preferred_element_type=jnp.float32) + b1

    # Zero the out-of-image halo rows (depthwise conv zero padding); mask is
    # generated in-kernel from the tile index instead of being DMA'd.
    t = pl.program_id(1)
    lane = lax.broadcasted_iota(jnp.int32, (1, L), 1)
    valid = ((lane >= W) | (t > 0)) & ((lane < W + S) | (t < n_tiles - 1))
    h = jnp.where(valid, h, 0.0)

    # Depthwise 3x3: build the two column-shifted copies once (the only two
    # unaligned lane shifts), then take row taps at W-multiple offsets of the
    # three buffers (lane-aligned whenever W % 128 == 0).
    zcol = jnp.zeros((h.shape[0], 1), h.dtype)
    hl = jnp.concatenate([zcol, h[:, :L - 1]], axis=1)   # value at column c-1
    hr = jnp.concatenate([h[:, 1:], zcol], axis=1)       # value at column c+1

    acc_l = jnp.zeros((h.shape[0], S), jnp.float32)
    acc_c = jnp.zeros_like(acc_l)
    acc_r = jnp.zeros_like(acc_l)
    for dh in (-1, 0, 1):
        off = (dh + 1) * W
        k = (dh + 1) * 3
        acc_l = acc_l + hl[:, off:off + S] * wdw[:, k:k + 1]
        acc_c = acc_c + h[:, off:off + S] * wdw[:, k + 1:k + 2]
        acc_r = acc_r + hr[:, off:off + S] * wdw[:, k + 2:k + 3]
    col = lax.broadcasted_iota(jnp.int32, (1, S), 1) % W
    dw_out = (jnp.where(col != 0, acc_l, 0.0) + acc_c
              + jnp.where(col != W - 1, acc_r, 0.0) + bdw)

    dw2 = dw_out.shape[0] // 2
    return dw_out[:dw2] * dw_out[dw2:]                    # SimpleGate (dw2, S)


# ---------------------------------------------------------------------------
# Kernel A: block_1 up to the gate; emit per-tile spatial partial sums only.
# ---------------------------------------------------------------------------
def _gate_pool_kernel(S, W, n_tiles, cd,
                      x_ref, halo_ref, lnw_ref, lnb_ref, w1_ref, b1_ref,
                      wdw_ref, bdw_ref, gsum_ref):
    g = _block1_gate(S, W, n_tiles, cd, x_ref[0], halo_ref[0, 0],
                     lnw_ref[...], lnb_ref[...], w1_ref[...], b1_ref[...],
                     wdw_ref[...], bdw_ref[...])
    gsum_ref[0, 0] = jnp.sum(g, axis=1, keepdims=True)


# ---------------------------------------------------------------------------
# Kernel B: full block (block_1 recomputed) given the pooled SCA scale.
# ---------------------------------------------------------------------------
def _block_kernel(S, W, n_tiles, identity_rc, cd,
                  x_ref, halo_ref, sca_ref,
                  lnw_ref, lnb_ref, w1_ref, b1_ref, wdw_ref, bdw_ref,
                  w3_ref, b3_ref, beta_ref,
                  ln2w_ref, ln2b_ref, w4_ref, b4_ref, w5_ref, b5_ref,
                  gamma_ref, *rest):
    if identity_rc:
        (out_ref,) = rest
    else:
        wr1_ref, br1_ref, wr2_ref, br2_ref, out_ref = rest

    x = x_ref[0]                                     # (Cin, S) f32
    g = _block1_gate(S, W, n_tiles, cd, x, halo_ref[0, 0],
                     lnw_ref[...], lnb_ref[...], w1_ref[...], b1_ref[...],
                     wdw_ref[...], bdw_ref[...])

    y = g * sca_ref[0]                               # SimplifiedChannelAttention
    h3 = jnp.dot(w3_ref[...], y.astype(cd),
                 preferred_element_type=jnp.float32) + b3_ref[...]
    int1 = h3 * beta_ref[...]
    if identity_rc:                                  # rc='skip' specialized
        res1 = x
    else:
        res1 = jnp.dot(wr1_ref[...], x.astype(cd),
                       preferred_element_type=jnp.float32) + br1_ref[...]
    out1 = int1 + res1                               # f32 residual add

    # block_2: LN -> fused 1x1 (ffn_ch) -> SimpleGate -> 1x1 -> *gamma -> +res2
    mu = jnp.mean(out1, axis=0, keepdims=True)
    xc = out1 - mu
    var = jnp.mean(xc * xc, axis=0, keepdims=True)
    xn2 = (xc * lax.rsqrt(var + LN_EPS) * ln2w_ref[...]
           + ln2b_ref[...]).astype(cd)
    h4 = jnp.dot(w4_ref[...], xn2,
                 preferred_element_type=jnp.float32) + b4_ref[...]
    ffn2 = h4.shape[0] // 2
    g2 = h4[:ffn2] * h4[ffn2:]                       # SimpleGate
    h5 = jnp.dot(w5_ref[...], g2.astype(cd),
                 preferred_element_type=jnp.float32) + b5_ref[...]
    int2 = h5 * gamma_ref[...]
    if identity_rc:
        res2 = out1
    else:
        res2 = jnp.dot(wr2_ref[...], out1.astype(cd),
                       preferred_element_type=jnp.float32) + br2_ref[...]
    out_ref[0] = (int2 + res2).astype(out_ref.dtype)


# ---------------------------------------------------------------------------
# Wrapper
# ---------------------------------------------------------------------------
def _default_vmem_limit():
    """Generation-aware VMEM cap: ~48 MiB on v7x (64 MiB/TC), ~96 MiB on
    v5e/v6e (128 MiB/TC)."""
    cap = 64 * 1024 * 1024
    try:
        cap = int(getattr(pltpu.get_tpu_info(), "vmem_capacity_bytes", cap))
    except Exception:
        pass
    return int(min(cap * 3 // 4, 100 * 1024 * 1024))


def _pick_tile_h(H, W, c_in, dw_ch, ffn_ch, out_ch, vmem_budget):
    """Largest row tile dividing H whose lane width is 128-aligned (or the
    whole image) and whose estimated VMEM residency fits the budget."""
    # Per-lane bytes: double-buffered x/out pipeline blocks + the f32
    # intermediates simultaneously live inside kernel B (conservative).
    per_lane = 4 * (5 * c_in + 6 * dw_ch + 2 * ffn_ch + 5 * out_ch)
    target = max(1024, min(vmem_budget // max(per_lane, 1), 32 * 1024))
    divisors = [d for d in range(1, H + 1) if H % d == 0]
    ok = [d for d in divisors if (d * W) % 128 == 0 or d == H]
    fit = [d for d in ok if d * W <= target]
    return max(fit) if fit else min(ok)


@functools.partial(jax.jit,
                   static_argnames=("tile_h", "compute_dtype",
                                    "vmem_limit_bytes"))
def nafnet_block(x, params, *, tile_h=None, compute_dtype=jnp.bfloat16,
                 vmem_limit_bytes=None):
    """NAFNetBlock forward. x: (N, Cin, H, W) f32 -> (N, Cout, H, W) f32."""
    f32 = jnp.float32
    x = x.astype(f32)
    N, Cin, H, W = x.shape

    dw_ch = params['w1'].shape[0]
    ffn_ch = params['w4'].shape[0]
    out_ch = params['w5'].shape[0]
    assert dw_ch % 2 == 0 and ffn_ch % 2 == 0
    dw2, ffn2 = dw_ch // 2, ffn_ch // 2
    identity_rc = 'wr1' not in params          # rc='skip' and in_ch == out_ch
    HW = H * W

    if vmem_limit_bytes is None:
        vmem_limit_bytes = _default_vmem_limit()
    if tile_h is None:
        tile_h = _pick_tile_h(H, W, Cin, dw_ch, ffn_ch, out_ch,
                              vmem_limit_bytes)
    assert H % tile_h == 0
    S = tile_h * W
    assert S % 128 == 0 or S == HW, "spatial tile must be lane-dense"
    n_tiles = H // tile_h
    L = S + 2 * W

    # Main input stays flat (no extended-tile gather); only the 2 halo rows per
    # tile are gathered host-side (tiny: 2/tile_h of the input).
    x_flat = x.reshape(N, Cin, HW)
    xpad = jnp.pad(x, ((0, 0), (0, 0), (1, 1), (0, 0)))          # (N,Cin,H+2,W)
    top = xpad[:, :, 0:H:tile_h, :]                              # row above
    bot = xpad[:, :, tile_h + 1::tile_h, :]                      # row below
    halo = jnp.transpose(jnp.concatenate([top, bot], axis=-1),
                         (0, 2, 1, 3))                           # (N,nt,Cin,2W)

    # ---- weights in kernel layout (Cout on sublanes; matmul weights bf16) ---
    cd = compute_dtype

    def col(a):
        return jnp.asarray(a, f32).reshape(-1, 1)

    a_weights = [
        col(params['ln1_w']), col(params['ln1_b']),
        jnp.asarray(params['w1'], cd), col(params['b1']),
        jnp.asarray(params['wdw'], f32), col(params['bdw']),
    ]
    b_weights = a_weights + [
        jnp.asarray(params['w3'], cd), col(params['b3']), col(params['beta']),
        col(params['ln2_w']), col(params['ln2_b']),
        jnp.asarray(params['w4'], cd), col(params['b4']),
        jnp.asarray(params['w5'], cd), col(params['b5']), col(params['gamma']),
    ]
    if not identity_rc:
        b_weights += [jnp.asarray(params['wr1'], cd), col(params['br1']),
                      jnp.asarray(params['wr2'], cd), col(params['br2'])]

    def const_spec(a):
        zeros = (0,) * a.ndim
        return pl.BlockSpec(a.shape, lambda n, t, _z=zeros: _z)

    def wbytes(ws):
        return sum(int(w.size) * jnp.dtype(w.dtype).itemsize for w in ws)

    # ---- pass A: gate partial sums (both grid axes parallel) ----------------
    cost_a = pl.CostEstimate(
        flops=int(N * n_tiles * (2 * dw_ch * Cin * L + 18 * dw_ch * S
                                 + 2 * dw2 * S)),
        transcendentals=int(N * n_tiles * L),
        bytes_accessed=int(x_flat.size * 4 + halo.size * 4 + wbytes(a_weights)
                           + N * n_tiles * dw2 * 4))

    gsum = pl.pallas_call(
        functools.partial(_gate_pool_kernel, S, W, n_tiles, cd),
        out_shape=jax.ShapeDtypeStruct((N, n_tiles, dw2, 1), f32),
        grid=(N, n_tiles),
        in_specs=[pl.BlockSpec((1, Cin, S), lambda n, t: (n, 0, t)),
                  pl.BlockSpec((1, 1, Cin, 2 * W), lambda n, t: (n, t, 0, 0))]
                 + [const_spec(a) for a in a_weights],
        out_specs=pl.BlockSpec((1, 1, dw2, 1), lambda n, t: (n, t, 0, 0)),
        compiler_params=pltpu.CompilerParams(
            dimension_semantics=("parallel", "parallel"),
            vmem_limit_bytes=vmem_limit_bytes),
        cost_estimate=cost_a,
    )(x_flat, halo, *a_weights)

    # SCA pooled 1x1 conv on the global mean: per-batch dw2 x dw2 GEMV in f32.
    pooled = jnp.sum(gsum[:, :, :, 0], axis=1) / float(HW)       # (N, dw2)
    wsca = jnp.asarray(params['wsca'], f32)
    bsca = jnp.asarray(params['bsca'], f32)
    sca = (pooled @ wsca.T + bsca)[:, :, None]                   # (N, dw2, 1)

    # ---- pass B: full block (block_1 recomputed; no g HBM round trip) -------
    rc_flops = 0 if identity_rc else 2 * (Cin * Cin + out_ch * Cin) * S
    cost_b = pl.CostEstimate(
        flops=int(N * n_tiles * (2 * dw_ch * Cin * L + 18 * dw_ch * S
                                 + 2 * dw2 * S + 2 * Cin * dw2 * S
                                 + 2 * ffn_ch * Cin * S + 2 * out_ch * ffn2 * S
                                 + rc_flops)),
        transcendentals=int(N * n_tiles * (L + S)),
        bytes_accessed=int(x_flat.size * 4 + halo.size * 4 + sca.size * 4
                           + wbytes(b_weights) + N * out_ch * HW * 4))

    out_flat = pl.pallas_call(
        functools.partial(_block_kernel, S, W, n_tiles, identity_rc, cd),
        out_shape=jax.ShapeDtypeStruct((N, out_ch, HW), f32),
        grid=(N, n_tiles),
        in_specs=[pl.BlockSpec((1, Cin, S), lambda n, t: (n, 0, t)),
                  pl.BlockSpec((1, 1, Cin, 2 * W), lambda n, t: (n, t, 0, 0)),
                  pl.BlockSpec((1, dw2, 1), lambda n, t: (n, 0, 0))]
                 + [const_spec(a) for a in b_weights],
        out_specs=pl.BlockSpec((1, out_ch, S), lambda n, t: (n, 0, t)),
        compiler_params=pltpu.CompilerParams(
            dimension_semantics=("parallel", "parallel"),
            vmem_limit_bytes=vmem_limit_bytes),
        cost_estimate=cost_b,
    )(x_flat, halo, sca, *b_weights)

    return out_flat.reshape(N, out_ch, H, W)


# ---------------------------------------------------------------------------
# Synthetic parameters + pure-JAX f32 reference (matches NAFNetBlock.forward).
# ---------------------------------------------------------------------------
def init_params(key, in_ch, out_ch, expand_ratio=2, FFN_ratio=2, rc='skip'):
    assert rc in ('skip', 'conv')
    dw_ch = expand_ratio * in_ch
    dw2 = dw_ch // 2
    ffn_ch = FFN_ratio * in_ch
    ffn2 = ffn_ch // 2
    ks = iter(jax.random.split(key, 24))

    def rnd(shape, scale=0.2):
        return jax.random.normal(next(ks), shape, jnp.float32) * scale

    p = {
        'ln1_w': 1.0 + rnd((in_ch,), 0.1), 'ln1_b': rnd((in_ch,), 0.1),
        'w1': rnd((dw_ch, in_ch)), 'b1': rnd((dw_ch,), 0.1),
        'wdw': rnd((dw_ch, 9)), 'bdw': rnd((dw_ch,), 0.1),
        'wsca': rnd((dw2, dw2)), 'bsca': rnd((dw2,), 0.1),
        'w3': rnd((in_ch, dw2)), 'b3': rnd((in_ch,), 0.1),
        # beta/gamma are zero-initialised in PyTorch; nonzero here so the test
        # actually exercises the block_1/block_2 paths.
        'beta': rnd((in_ch,), 0.5),
        'ln2_w': 1.0 + rnd((in_ch,), 0.1), 'ln2_b': rnd((in_ch,), 0.1),
        'w4': rnd((ffn_ch, in_ch)), 'b4': rnd((ffn_ch,), 0.1),
        'w5': rnd((out_ch, ffn2)), 'b5': rnd((out_ch,), 0.1),
        'gamma': rnd((out_ch,), 0.5),
    }
    if not (rc == 'skip' and in_ch == out_ch):
        p['wr1'] = rnd((in_ch, in_ch))
        p['br1'] = rnd((in_ch,), 0.1)
        p['wr2'] = rnd((out_ch, in_ch))
        p['br2'] = rnd((out_ch,), 0.1)
    return p


def _layer_norm_2d(x, w, b):
    mu = jnp.mean(x, axis=1, keepdims=True)
    var = jnp.mean((x - mu) ** 2, axis=1, keepdims=True)
    return ((x - mu) / jnp.sqrt(var + LN_EPS)
            * w.reshape(1, -1, 1, 1) + b.reshape(1, -1, 1, 1))


def reference(x, p):
    identity_rc = 'wr1' not in p
    dw_ch = p['w1'].shape[0]

    def conv1x1(h, w, b):
        return jnp.einsum('nchw,oc->nohw', h, w) + b.reshape(1, -1, 1, 1)

    # block_1
    h = _layer_norm_2d(x, p['ln1_w'], p['ln1_b'])
    h = conv1x1(h, p['w1'], p['b1'])
    k = p['wdw'].reshape(dw_ch, 1, 3, 3)
    h = lax.conv_general_dilated(
        h, k, (1, 1), ((1, 1), (1, 1)),
        dimension_numbers=('NCHW', 'OIHW', 'NCHW'),
        feature_group_count=dw_ch) + p['bdw'].reshape(1, -1, 1, 1)
    h1, h2 = jnp.split(h, 2, axis=1)
    g = h1 * h2                                           # SimpleGate
    pooled = jnp.mean(g, axis=(2, 3))                     # AdaptiveAvgPool2d(1)
    scale = pooled @ p['wsca'].T + p['bsca']
    h = g * scale[:, :, None, None]                       # SCA
    h = conv1x1(h, p['w3'], p['b3'])
    int1 = h * p['beta'].reshape(1, -1, 1, 1)
    res1 = x if identity_rc else conv1x1(x, p['wr1'], p['br1'])
    out1 = int1 + res1
    # block_2
    h = _layer_norm_2d(out1, p['ln2_w'], p['ln2_b'])
    h = conv1x1(h, p['w4'], p['b4'])
    h1, h2 = jnp.split(h, 2, axis=1)
    h = h1 * h2
    h = conv1x1(h, p['w5'], p['b5'])
    int2 = h * p['gamma'].reshape(1, -1, 1, 1)
    res2 = out1 if identity_rc else conv1x1(out1, p['wr2'], p['br2'])
    return int2 + res2


if __name__ == "__main__":
    key = jax.random.PRNGKey(0)
    k1, k2, k3, k4 = jax.random.split(key, 4)

    # Case 1: rc='skip', in_ch == out_ch, forced 2 spatial tiles (exercises the
    # halo rows and the per-tile SCA pooling partial sums).
    N, C, H, W = 2, 4, 16, 16
    x = jax.random.normal(k1, (N, C, H, W), jnp.float32)
    params = init_params(k2, C, C, expand_ratio=2, FFN_ratio=2, rc='skip')
    y = jax.block_until_ready(nafnet_block(x, params, tile_h=8))
    np.testing.assert_allclose(np.asarray(y), np.asarray(reference(x, params)),
                               rtol=2e-2, atol=2e-2)

    # Case 2: rc='conv', in_ch != out_ch, auto (whole-image) tile.
    Cin2, Cout2 = 4, 8
    x2 = jax.random.normal(k3, (1, Cin2, H, W), jnp.float32)
    params2 = init_params(k4, Cin2, Cout2, expand_ratio=2, FFN_ratio=2,
                          rc='conv')
    y2 = jax.block_until_ready(nafnet_block(x2, params2))
    np.testing.assert_allclose(np.asarray(y2),
                               np.asarray(reference(x2, params2)),
                               rtol=2e-2, atol=2e-2)

    print("KERNEL_OK")
</pallas_src>

<mosaic_0001>
module attributes {stable_mosaic.version = 11 : i64} {
  func.func @_gate_pool_kernel(%arg0: i32, %arg1: i32, %arg2: memref<1x4x128xf32, #tpu.memory_space<vmem>>, %arg3: memref<1x1x4x32xf32, #tpu.memory_space<vmem>>, %arg4: memref<4x1xf32, #tpu.memory_space<vmem>>, %arg5: memref<4x1xf32, #tpu.memory_space<vmem>>, %arg6: memref<8x4xbf16, #tpu.memory_space<vmem>>, %arg7: memref<8x1xf32, #tpu.memory_space<vmem>>, %arg8: memref<8x9xf32, #tpu.memory_space<vmem>>, %arg9: memref<8x1xf32, #tpu.memory_space<vmem>>, %arg10: memref<1x1x4x1xf32, #tpu.memory_space<vmem>>) attributes {dimension_semantics = [#tpu.dimension_semantics<parallel>, #tpu.dimension_semantics<parallel>], iteration_bounds = array<i64: 2, 2>, scalar_prefetch = 0 : i64, scratch_operands = 0 : i64, tpu.core_type = #tpu.core_type<tc>, window_params = [{transform_indices = @transform_0, window_bounds = array<i64: 1, 4, 128>}, {transform_indices = @transform_1, window_bounds = array<i64: 1, 1, 4, 32>}, {pipeline_mode = #tpu.pipeline_mode<synchronous>, transform_indices = @transform_2, window_bounds = array<i64: 4, 1>}, {pipeline_mode = #tpu.pipeline_mode<synchronous>, transform_indices = @transform_3, window_bounds = array<i64: 4, 1>}, {pipeline_mode = #tpu.pipeline_mode<synchronous>, transform_indices = @transform_4, window_bounds = array<i64: 8, 4>}, {pipeline_mode = #tpu.pipeline_mode<synchronous>, transform_indices = @transform_5, window_bounds = array<i64: 8, 1>}, {pipeline_mode = #tpu.pipeline_mode<synchronous>, transform_indices = @transform_6, window_bounds = array<i64: 8, 9>}, {pipeline_mode = #tpu.pipeline_mode<synchronous>, transform_indices = @transform_7, window_bounds = array<i64: 8, 1>}, {transform_indices = @transform_8, window_bounds = array<i64: 1, 1, 4, 1>}]} {
    %c0 = arith.constant 0 : index
    %c0_0 = arith.constant 0 : index
    %c0_1 = arith.constant 0 : index
    %0 = vector.load %arg2[%c0, %c0_0, %c0_1] : memref<1x4x128xf32, #tpu.memory_space<vmem>>, vector<1x4x128xf32>
    %1 = vector.shape_cast %0 : vector<1x4x128xf32> to vector<4x128xf32>
    %c0_2 = arith.constant 0 : index
    %c0_3 = arith.constant 0 : index
    %c0_4 = arith.constant 0 : index
    %c0_5 = arith.constant 0 : index
    %2 = vector.load %arg3[%c0_2, %c0_3, %c0_4, %c0_5] : memref<1x1x4x32xf32, #tpu.memory_space<vmem>>, vector<1x1x4x32xf32>
    %3 = vector.shape_cast %2 : vector<1x1x4x32xf32> to vector<4x32xf32>
    %c0_6 = arith.constant 0 : index
    %c0_7 = arith.constant 0 : index
    %4 = vector.load %arg4[%c0_6, %c0_7] : memref<4x1xf32, #tpu.memory_space<vmem>>, vector<4x1xf32>
    %c0_8 = arith.constant 0 : index
    %c0_9 = arith.constant 0 : index
    %5 = vector.load %arg5[%c0_8, %c0_9] : memref<4x1xf32, #tpu.memory_space<vmem>>, vector<4x1xf32>
    %c0_10 = arith.constant 0 : index
    %c0_11 = arith.constant 0 : index
    %6 = vector.load %arg6[%c0_10, %c0_11] : memref<8x4xbf16, #tpu.memory_space<vmem>>, vector<8x4xbf16>
    %c0_12 = arith.constant 0 : index
    %c0_13 = arith.constant 0 : index
    %7 = vector.load %arg7[%c0_12, %c0_13] : memref<8x1xf32, #tpu.memory_space<vmem>>, vector<8x1xf32>
    %c0_14 = arith.constant 0 : index
    %c0_15 = arith.constant 0 : index
    %8 = vector.load %arg8[%c0_14, %c0_15] : memref<8x9xf32, #tpu.memory_space<vmem>>, vector<8x9xf32>
    %c0_16 = arith.constant 0 : index
    %c0_17 = arith.constant 0 : index
    %9 = vector.load %arg9[%c0_16, %c0_17] : memref<8x1xf32, #tpu.memory_space<vmem>>, vector<8x1xf32>
    %10 = vector.extract_strided_slice %3 {offsets = [0, 0], sizes = [4, 16], strides = [1, 1]} : vector<4x32xf32> to vector<4x16xf32>
    %11 = vector.extract_strided_slice %3 {offsets = [0, 16], sizes = [4, 16], strides = [1, 1]} : vector<4x32xf32> to vector<4x16xf32>
    %12 = tpu.concatenate %10, %1, %11 in 1 : vector<4x16xf32>, vector<4x128xf32>, vector<4x16xf32> -> vector<4x160xf32>
    %cst = arith.constant dense<0.000000e+00> : vector<160xf32>
    %13 = vector.multi_reduction <add>, %12, %cst [0] : vector<4x160xf32> to vector<160xf32>
    %14 = vector.shape_cast %13 : vector<160xf32> to vector<1x160xf32>
    %cst_18 = arith.constant 4.000000e+00 : f32
    %15 = vector.broadcast %cst_18 : f32 to vector<1x160xf32>
    %16 = arith.divf %14, %15 : vector<1x160xf32>
    %17 = vector.broadcast %16 : vector<1x160xf32> to vector<4x160xf32>
    %18 = arith.subf %12, %17 : vector<4x160xf32>
    %19 = arith.mulf %18, %18 : vector<4x160xf32>
    %cst_19 = arith.constant dense<0.000000e+00> : vector<160xf32>
    %20 = vector.multi_reduction <add>, %19, %cst_19 [0] : vector<4x160xf32> to vector<160xf32>
    %21 = vector.shape_cast %20 : vector<160xf32> to vector<1x160xf32>
    %cst_20 = arith.constant 4.000000e+00 : f32
    %22 = vector.broadcast %cst_20 : f32 to vector<1x160xf32>
    %23 = arith.divf %21, %22 : vector<1x160xf32>
    %cst_21 = arith.constant 9.99999997E-7 : f32
    %24 = vector.broadcast %cst_21 : f32 to vector<1x160xf32>
    %25 = arith.addf %23, %24 : vector<1x160xf32>
    %26 = math.rsqrt %25 : vector<1x160xf32>
    %27 = vector.broadcast %26 : vector<1x160xf32> to vector<4x160xf32>
    %28 = arith.mulf %18, %27 : vector<4x160xf32>
    %29 = vector.broadcast %4 : vector<4x1xf32> to vector<4x160xf32>
    %30 = arith.mulf %28, %29 : vector<4x160xf32>
    %31 = vector.broadcast %5 : vector<4x1xf32> to vector<4x160xf32>
    %32 = arith.addf %30, %31 : vector<4x160xf32>
    %33 = arith.truncf %32 : vector<4x160xf32> to vector<4x160xbf16>
    %cst_22 = arith.constant dense<0.000000e+00> : vector<8x160xf32>
    %34 = tpu.matmul %6, %33, %cst_22 {dimension_numbers = #tpu.dot_dimension_numbers<[1], [0], [0], [1], [0, 0, 1, 1], [], []>} : vector<8x4xbf16>, vector<4x160xbf16>, vector<8x160xf32> -> vector<8x160xf32>
    %35 = vector.broadcast %7 : vector<8x1xf32> to vector<8x160xf32>
    %36 = arith.addf %34, %35 : vector<8x160xf32>
    %37 = tpu.iota {dimensions = array<i32: 1>} : vector<1x160xi32>
    %c16_i32 = arith.constant 16 : i32
    %38 = vector.broadcast %c16_i32 : i32 to vector<1x160xi32>
    %39 = arith.cmpi sge, %37, %38 : vector<1x160xi32>
    %c0_i32 = arith.constant 0 : i32
    %40 = arith.cmpi sgt, %arg1, %c0_i32 : i32
    %41 = vector.broadcast %40 : i1 to vector<1x160xi1>
    %42 = arith.ori %39, %41 : vector<1x160xi1>
    %c144_i32 = arith.constant 144 : i32
    %43 = vector.broadcast %c144_i32 : i32 to vector<1x160xi32>
    %44 = arith.cmpi slt, %37, %43 : vector<1x160xi32>
    %c1_i32 = arith.constant 1 : i32
    %45 = arith.cmpi slt, %arg1, %c1_i32 : i32
    %46 = vector.broadcast %45 : i1 to vector<1x160xi1>
    %47 = arith.ori %44, %46 : vector<1x160xi1>
    %48 = arith.andi %42, %47 : vector<1x160xi1>
    %cst_23 = arith.constant 0.000000e+00 : f32
    %49 = vector.shape_cast %48 : vector<1x160xi1> to vector<1x160xi1>
    %50 = vector.broadcast %49 : vector<1x160xi1> to vector<8x160xi1>
    %51 = vector.broadcast %cst_23 : f32 to vector<8x160xf32>
    %52 = arith.select %50, %36, %51 : vector<8x160xi1>, vector<8x160xf32>
    %cst_24 = arith.constant 0.000000e+00 : f32
    %53 = vector.broadcast %cst_24 : f32 to vector<8x1xf32>
    %54 = vector.extract_strided_slice %52 {offsets = [0, 0], sizes = [8, 159], strides = [1, 1]} : vector<8x160xf32> to vector<8x159xf32>
    %55 = tpu.concatenate %53, %54 in 1 : vector<8x1xf32>, vector<8x159xf32> -> vector<8x160xf32>
    %56 = vector.extract_strided_slice %52 {offsets = [0, 1], sizes = [8, 159], strides = [1, 1]} : vector<8x160xf32> to vector<8x159xf32>
    %57 = tpu.concatenate %56, %53 in 1 : vector<8x159xf32>, vector<8x1xf32> -> vector<8x160xf32>
    %cst_25 = arith.constant 0.000000e+00 : f32
    %58 = vector.broadcast %cst_25 : f32 to vector<8x128xf32>
    %cst_26 = arith.constant 0.000000e+00 : f32
    %59 = vector.broadcast %cst_26 : f32 to vector<8x128xf32>
    %cst_27 = arith.constant 0.000000e+00 : f32
    %60 = vector.broadcast %cst_27 : f32 to vector<8x128xf32>
    %61 = vector.extract_strided_slice %55 {offsets = [0, 0], sizes = [8, 128], strides = [1, 1]} : vector<8x160xf32> to vector<8x128xf32>
    %62 = vector.extract_strided_slice %8 {offsets = [0, 0], sizes = [8, 1], strides = [1, 1]} : vector<8x9xf32> to vector<8x1xf32>
    %63 = vector.broadcast %62 : vector<8x1xf32> to vector<8x128xf32>
    %64 = arith.mulf %61, %63 : vector<8x128xf32>
    %65 = arith.addf %58, %64 : vector<8x128xf32>
    %66 = vector.extract_strided_slice %52 {offsets = [0, 0], sizes = [8, 128], strides = [1, 1]} : vector<8x160xf32> to vector<8x128xf32>
    %67 = vector.extract_strided_slice %8 {offsets = [0, 1], sizes = [8, 1], strides = [1, 1]} : vector<8x9xf32> to vector<8x1xf32>
    %68 = vector.broadcast %67 : vector<8x1xf32> to vector<8x128xf32>
    %69 = arith.mulf %66, %68 : vector<8x128xf32>
    %70 = arith.addf %59, %69 : vector<8x128xf32>
    %71 = vector.extract_strided_slice %57 {offsets = [0, 0], sizes = [8, 128], strides = [1, 1]} : vector<8x160xf32> to vector<8x128xf32>
    %72 = vector.extract_strided_slice %8 {offsets = [0, 2], sizes = [8, 1], strides = [1, 1]} : vector<8x9xf32> to vector<8x1xf32>
    %73 = vector.broadcast %72 : vector<8x1xf32> to vector<8x128xf32>
    %74 = arith.mulf %71, %73 : vector<8x128xf32>
    %75 = arith.addf %60, %74 : vector<8x128xf32>
    %76 = vector.extract_strided_slice %55 {offsets = [0, 16], sizes = [8, 128], strides = [1, 1]} : vector<8x160xf32> to vector<8x128xf32>
    %77 = vector.extract_strided_slice %8 {offsets = [0, 3], sizes = [8, 1], strides = [1, 1]} : vector<8x9xf32> to vector<8x1xf32>
    %78 = vector.broadcast %77 : vector<8x1xf32> to vector<8x128xf32>
    %79 = arith.mulf %76, %78 : vector<8x128xf32>
    %80 = arith.addf %65, %79 : vector<8x128xf32>
    %81 = vector.extract_strided_slice %52 {offsets = [0, 16], sizes = [8, 128], strides = [1, 1]} : vector<8x160xf32> to vector<8x128xf32>
    %82 = vector.extract_strided_slice %8 {offsets = [0, 4], sizes = [8, 1], strides = [1, 1]} : vector<8x9xf32> to vector<8x1xf32>
    %83 = vector.broadcast %82 : vector<8x1xf32> to vector<8x128xf32>
    %84 = arith.mulf %81, %83 : vector<8x128xf32>
    %85 = arith.addf %70, %84 : vector<8x128xf32>
    %86 = vector.extract_strided_slice %57 {offsets = [0, 16], sizes = [8, 128], strides = [1, 1]} : vector<8x160xf32> to vector<8x128xf32>
    %87 = vector.extract_strided_slice %8 {offsets = [0, 5], sizes = [8, 1], strides = [1, 1]} : vector<8x9xf32> to vector<8x1xf32>
    %88 = vector.broadcast %87 : vector<8x1xf32> to vector<8x128xf32>
    %89 = arith.mulf %86, %88 : vector<8x128xf32>
    %90 = arith.addf %75, %89 : vector<8x128xf32>
    %91 = vector.extract_strided_slice %55 {offsets = [0, 32], sizes = [8, 128], strides = [1, 1]} : vector<8x160xf32> to vector<8x128xf32>
    %92 = vector.extract_strided_slice %8 {offsets = [0, 6], sizes = [8, 1], strides = [1, 1]} : vector<8x9xf32> to vector<8x1xf32>
    %93 = vector.broadcast %92 : vector<8x1xf32> to vector<8x128xf32>
    %94 = arith.mulf %91, %93 : vector<8x128xf32>
    %95 = arith.addf %80, %94 : vector<8x128xf32>
    %96 = vector.extract_strided_slice %52 {offsets = [0, 32], sizes = [8, 128], strides = [1, 1]} : vector<8x160xf32> to vector<8x128xf32>
    %97 = vector.extract_strided_slice %8 {offsets = [0, 7], sizes = [8, 1], strides = [1, 1]} : vector<8x9xf32> to vector<8x1xf32>
    %98 = vector.broadcast %97 : vector<8x1xf32> to vector<8x128xf32>
    %99 = arith.mulf %96, %98 : vector<8x128xf32>
    %100 = arith.addf %85, %99 : vector<8x128xf32>
    %101 = vector.extract_strided_slice %57 {offsets = [0, 32], sizes = [8, 128], strides = [1, 1]} : vector<8x160xf32> to vector<8x128xf32>
    %102 = vector.extract_strided_slice %8 {offsets = [0, 8], sizes = [8, 1], strides = [1, 1]} : vector<8x9xf32> to vector<8x1xf32>
    %103 = vector.broadcast %102 : vector<8x1xf32> to vector<8x128xf32>
    %104 = arith.mulf %101, %103 : vector<8x128xf32>
    %105 = arith.addf %90, %104 : vector<8x128xf32>
    %106 = tpu.iota {dimensions = array<i32: 1>} : vector<1x128xi32>
    %c16_i32_28 = arith.constant 16 : i32
    %c0_i32_29 = arith.constant 0 : i32
    %107 = arith.cmpi eq, %c16_i32_28, %c0_i32_29 : i32
    %c1_i32_30 = arith.constant 1 : i32
    %108 = arith.select %107, %c1_i32_30, %c16_i32_28 : i32
    %109 = vector.broadcast %108 : i32 to vector<1x128xi32>
    %110 = arith.remsi %106, %109 : vector<1x128xi32>
    %c0_i32_31 = arith.constant 0 : i32
    %111 = vector.broadcast %c0_i32_31 : i32 to vector<1x128xi32>
    %112 = arith.cmpi ne, %110, %111 : vector<1x128xi32>
    %c0_i32_32 = arith.constant 0 : i32
    %113 = vector.broadcast %c0_i32_32 : i32 to vector<1x128xi32>
    %114 = arith.cmpi slt, %110, %113 : vector<1x128xi32>
    %c0_i32_33 = arith.constant 0 : i32
    %115 = arith.cmpi slt, %108, %c0_i32_33 : i32
    %116 = vector.broadcast %115 : i1 to vector<1x128xi1>
    %117 = vector.broadcast %116 : vector<1x128xi1> to vector<1x128xi1>
    %118 = arith.xori %114, %117 : vector<1x128xi1>
    %119 = arith.andi %118, %112 : vector<1x128xi1>
    %120 = vector.broadcast %108 : i32 to vector<1x128xi32>
    %121 = arith.addi %110, %120 : vector<1x128xi32>
    %122 = arith.select %119, %121, %110 : vector<1x128xi1>, vector<1x128xi32>
    %c0_i32_34 = arith.constant 0 : i32
    %123 = vector.broadcast %c0_i32_34 : i32 to vector<1x128xi32>
    %124 = arith.cmpi ne, %122, %123 : vector<1x128xi32>
    %cst_35 = arith.constant 0.000000e+00 : f32
    %125 = vector.shape_cast %124 : vector<1x128xi1> to vector<1x128xi1>
    %126 = vector.broadcast %125 : vector<1x128xi1> to vector<8x128xi1>
    %127 = vector.broadcast %cst_35 : f32 to vector<8x128xf32>
    %128 = arith.select %126, %95, %127 : vector<8x128xi1>, vector<8x128xf32>
    %129 = arith.addf %128, %100 : vector<8x128xf32>
    %c15_i32 = arith.constant 15 : i32
    %130 = vector.broadcast %c15_i32 : i32 to vector<1x128xi32>
    %131 = arith.cmpi ne, %122, %130 : vector<1x128xi32>
    %cst_36 = arith.constant 0.000000e+00 : f32
    %132 = vector.shape_cast %131 : vector<1x128xi1> to vector<1x128xi1>
    %133 = vector.broadcast %132 : vector<1x128xi1> to vector<8x128xi1>
    %134 = vector.broadcast %cst_36 : f32 to vector<8x128xf32>
    %135 = arith.select %133, %105, %134 : vector<8x128xi1>, vector<8x128xf32>
    %136 = arith.addf %129, %135 : vector<8x128xf32>
    %137 = vector.broadcast %9 : vector<8x1xf32> to vector<8x128xf32>
    %138 = arith.addf %136, %137 : vector<8x128xf32>
    %139 = vector.extract_strided_slice %138 {offsets = [0, 0], sizes = [4, 128], strides = [1, 1]} : vector<8x128xf32> to vector<4x128xf32>
    %140 = vector.extract_strided_slice %138 {offsets = [4, 0], sizes = [4, 128], strides = [1, 1]} : vector<8x128xf32> to vector<4x128xf32>
    %141 = arith.mulf %139, %140 : vector<4x128xf32>
    %cst_37 = arith.constant dense<0.000000e+00> : vector<4xf32>
    %142 = vector.multi_reduction <add>, %141, %cst_37 [1] : vector<4x128xf32> to vector<4xf32>
    %143 = vector.shape_cast %142 : vector<4xf32> to vector<4x1xf32>
    %c0_38 = arith.constant 0 : index
    %c0_39 = arith.constant 0 : index
    %c0_40 = arith.constant 0 : index
    %c0_41 = arith.constant 0 : index
    %144 = vector.load %arg10[%c0_38, %c0_39, %c0_40, %c0_41] : memref<1x1x4x1xf32, #tpu.memory_space<vmem>>, vector<1x1x4x1xf32>
    %145 = vector.shape_cast %144 : vector<1x1x4x1xf32> to vector<4x1xf32>
    %146 = vector.shape_cast %143 : vector<4x1xf32> to vector<1x1x4x1xf32>
    tpu.vector_store %arg10[%c0_38, %c0_39, %c0_40, %c0_41], %146 {strides = array<i32>} : memref<1x1x4x1xf32, #tpu.memory_space<vmem>>, vector<1x1x4x1xf32>,
    return
  }
  func.func @transform_0(%arg0: i32, %arg1: i32) -> (i32, i32, i32) {
    %c0_i32 = arith.constant 0 : i32
    %c0_i32_0 = arith.constant 0 : i32
    return %arg0, %c0_i32, %arg1 : i32, i32, i32
  }
  func.func @transform_1(%arg0: i32, %arg1: i32) -> (i32, i32, i32, i32) {
    %c0_i32 = arith.constant 0 : i32
    %c0_i32_0 = arith.constant 0 : i32
    %c0_i32_1 = arith.constant 0 : i32
    return %arg0, %arg1, %c0_i32, %c0_i32_0 : i32, i32, i32, i32
  }
  func.func @transform_2(%arg0: i32, %arg1: i32) -> (i32, i32) {
    %c0_i32 = arith.constant 0 : i32
    %c0_i32_0 = arith.constant 0 : i32
    %c0_i32_1 = arith.constant 0 : i32
    return %c0_i32, %c0_i32_0 : i32, i32
  }
  func.func @transform_3(%arg0: i32, %arg1: i32) -> (i32, i32) {
    %c0_i32 = arith.constant 0 : i32
    %c0_i32_0 = arith.constant 0 : i32
    %c0_i32_1 = arith.constant 0 : i32
    return %c0_i32, %c0_i32_0 : i32, i32
  }
  func.func @transform_4(%arg0: i32, %arg1: i32) -> (i32, i32) {
    %c0_i32 = arith.constant 0 : i32
    %c0_i32_0 = arith.constant 0 : i32
    %c0_i32_1 = arith.constant 0 : i32
    return %c0_i32, %c0_i32_0 : i32, i32
  }
  func.func @transform_5(%arg0: i32, %arg1: i32) -> (i32, i32) {
    %c0_i32 = arith.constant 0 : i32
    %c0_i32_0 = arith.constant 0 : i32
    %c0_i32_1 = arith.constant 0 : i32
    return %c0_i32, %c0_i32_0 : i32, i32
  }
  func.func @transform_6(%arg0: i32, %arg1: i32) -> (i32, i32) {
    %c0_i32 = arith.constant 0 : i32
    %c0_i32_0 = arith.constant 0 : i32
    %c0_i32_1 = arith.constant 0 : i32
    return %c0_i32, %c0_i32_0 : i32, i32
  }
  func.func @transform_7(%arg0: i32, %arg1: i32) -> (i32, i32) {
    %c0_i32 = arith.constant 0 : i32
    %c0_i32_0 = arith.constant 0 : i32
    %c0_i32_1 = arith.constant 0 : i32
    return %c0_i32, %c0_i32_0 : i32, i32
  }
  func.func @transform_8(%arg0: i32, %arg1: i32) -> (i32, i32, i32, i32) {
    %c0_i32 = arith.constant 0 : i32
    %c0_i32_0 = arith.constant 0 : i32
    %c0_i32_1 = arith.constant 0 : i32
    return %arg0, %arg1, %c0_i32, %c0_i32_0 : i32, i32, i32, i32
  }
}

module attributes {stable_mosaic.version = 11 : i64} {
  func.func @_block_kernel(%arg0: i32, %arg1: i32, %arg2: memref<1x4x128xf32, #tpu.memory_space<vmem>>, %arg3: memref<1x1x4x32xf32, #tpu.memory_space<vmem>>, %arg4: memref<1x4x1xf32, #tpu.memory_space<vmem>>, %arg5: memref<4x1xf32, #tpu.memory_space<vmem>>, %arg6: memref<4x1xf32, #tpu.memory_space<vmem>>, %arg7: memref<8x4xbf16, #tpu.memory_space<vmem>>, %arg8: memref<8x1xf32, #tpu.memory_space<vmem>>, %arg9: memref<8x9xf32, #tpu.memory_space<vmem>>, %arg10: memref<8x1xf32, #tpu.memory_space<vmem>>, %arg11: memref<4x4xbf16, #tpu.memory_space<vmem>>, %arg12: memref<4x1xf32, #tpu.memory_space<vmem>>, %arg13: memref<4x1xf32, #tpu.memory_space<vmem>>, %arg14: memref<4x1xf32, #tpu.memory_space<vmem>>, %arg15: memref<4x1xf32, #tpu.memory_space<vmem>>, %arg16: memref<8x4xbf16, #tpu.memory_space<vmem>>, %arg17: memref<8x1xf32, #tpu.memory_space<vmem>>, %arg18: memref<4x4xbf16, #tpu.memory_space<vmem>>, %arg19: memref<4x1xf32, #tpu.memory_space<vmem>>, %arg20: memref<4x1xf32, #tpu.memory_space<vmem>>, %arg21: memref<1x4x128xf32, #tpu.memory_space<vmem>>) attributes {dimension_semantics = [#tpu.dimension_semantics<parallel>, #tpu.dimension_semantics<parallel>], iteration_bounds = array<i64: 2, 2>, scalar_prefetch = 0 : i64, scratch_operands = 0 : i64, tpu.core_type = #tpu.core_type<tc>, window_params = [{transform_indices = @transform_0, window_bounds = array<i64: 1, 4, 128>}, {transform_indices = @transform_1, window_bounds = array<i64: 1, 1, 4, 32>}, {transform_indices = @transform_2, window_bounds = array<i64: 1, 4, 1>}, {pipeline_mode = #tpu.pipeline_mode<synchronous>, transform_indices = @transform_3, window_bounds = array<i64: 4, 1>}, {pipeline_mode = #tpu.pipeline_mode<synchronous>, transform_indices = @transform_4, window_bounds = array<i64: 4, 1>}, {pipeline_mode = #tpu.pipeline_mode<synchronous>, transform_indices = @transform_5, window_bounds = array<i64: 8, 4>}, {pipeline_mode = #tpu.pipeline_mode<synchronous>, transform_indices = @transform_6, window_bounds = array<i64: 8, 1>}, {pipeline_mode = #tpu.pipeline_mode<synchronous>, transform_indices = @transform_7, window_bounds = array<i64: 8, 9>}, {pipeline_mode = #tpu.pipeline_mode<synchronous>, transform_indices = @transform_8, window_bounds = array<i64: 8, 1>}, {pipeline_mode = #tpu.pipeline_mode<synchronous>, transform_indices = @transform_9, window_bounds = array<i64: 4, 4>}, {pipeline_mode = #tpu.pipeline_mode<synchronous>, transform_indices = @transform_10, window_bounds = array<i64: 4, 1>}, {pipeline_mode = #tpu.pipeline_mode<synchronous>, transform_indices = @transform_11, window_bounds = array<i64: 4, 1>}, {pipeline_mode = #tpu.pipeline_mode<synchronous>, transform_indices = @transform_12, window_bounds = array<i64: 4, 1>}, {pipeline_mode = #tpu.pipeline_mode<synchronous>, transform_indices = @transform_13, window_bounds = array<i64: 4, 1>}, {pipeline_mode = #tpu.pipeline_mode<synchronous>, transform_indices = @transform_14, window_bounds = array<i64: 8, 4>}, {pipeline_mode = #tpu.pipeline_mode<synchronous>, transform_indices = @transform_15, window_bounds = array<i64: 8, 1>}, {pipeline_mode = #tpu.pipeline_mode<synchronous>, transform_indices = @transform_16, window_bounds = array<i64: 4, 4>}, {pipeline_mode = #tpu.pipeline_mode<synchronous>, transform_indices = @transform_17, window_bounds = array<i64: 4, 1>}, {pipeline_mode = #tpu.pipeline_mode<synchronous>, transform_indices = @transform_18, window_bounds = array<i64: 4, 1>}, {transform_indices = @transform_19, window_bounds = array<i64: 1, 4, 128>}]} {
    %c0 = arith.constant 0 : index
    %c0_0 = arith.constant 0 : index
    %c0_1 = arith.constant 0 : index
    %0 = vector.load %arg2[%c0, %c0_0, %c0_1] : memref<1x4x128xf32, #tpu.memory_space<vmem>>, vector<1x4x128xf32>
    %1 = vector.shape_cast %0 : vector<1x4x128xf32> to vector<4x128xf32>
    %c0_2 = arith.constant 0 : index
    %c0_3 = arith.constant 0 : index
    %c0_4 = arith.constant 0 : index
    %c0_5 = arith.constant 0 : index
    %2 = vector.load %arg3[%c0_2, %c0_3, %c0_4, %c0_5] : memref<1x1x4x32xf32, #tpu.memory_space<vmem>>, vector<1x1x4x32xf32>
    %3 = vector.shape_cast %2 : vector<1x1x4x32xf32> to vector<4x32xf32>
    %c0_6 = arith.constant 0 : index
    %c0_7 = arith.constant 0 : index
    %4 = vector.load %arg5[%c0_6, %c0_7] : memref<4x1xf32, #tpu.memory_space<vmem>>, vector<4x1xf32>
    %c0_8 = arith.constant 0 : index
    %c0_9 = arith.constant 0 : index
    %5 = vector.load %arg6[%c0_8, %c0_9] : memref<4x1xf32, #tpu.memory_space<vmem>>, vector<4x1xf32>
    %c0_10 = arith.constant 0 : index
    %c0_11 = arith.constant 0 : index
    %6 = vector.load %arg7[%c0_10, %c0_11] : memref<8x4xbf16, #tpu.memory_space<vmem>>, vector<8x4xbf16>
    %c0_12 = arith.constant 0 : index
    %c0_13 = arith.constant 0 : index
    %7 = vector.load %arg8[%c0_12, %c0_13] : memref<8x1xf32, #tpu.memory_space<vmem>>, vector<8x1xf32>
    %c0_14 = arith.constant 0 : index
    %c0_15 = arith.constant 0 : index
    %8 = vector.load %arg9[%c0_14, %c0_15] : memref<8x9xf32, #tpu.memory_space<vmem>>, vector<8x9xf32>
    %c0_16 = arith.constant 0 : index
    %c0_17 = arith.constant 0 : index
    %9 = vector.load %arg10[%c0_16, %c0_17] : memref<8x1xf32, #tpu.memory_space<vmem>>, vector<8x1xf32>
    %10 = vector.extract_strided_slice %3 {offsets = [0, 0], sizes = [4, 16], strides = [1, 1]} : vector<4x32xf32> to vector<4x16xf32>
    %11 = vector.extract_strided_slice %3 {offsets = [0, 16], sizes = [4, 16], strides = [1, 1]} : vector<4x32xf32> to vector<4x16xf32>
    %12 = tpu.concatenate %10, %1, %11 in 1 : vector<4x16xf32>, vector<4x128xf32>, vector<4x16xf32> -> vector<4x160xf32>
    %cst = arith.constant dense<0.000000e+00> : vector<160xf32>
    %13 = vector.multi_reduction <add>, %12, %cst [0] : vector<4x160xf32> to vector<160xf32>
    %14 = vector.shape_cast %13 : vector<160xf32> to vector<1x160xf32>
    %cst_18 = arith.constant 4.000000e+00 : f32
    %15 = vector.broadcast %cst_18 : f32 to vector<1x160xf32>
    %16 = arith.divf %14, %15 : vector<1x160xf32>
    %17 = vector.broadcast %16 : vector<1x160xf32> to vector<4x160xf32>
    %18 = arith.subf %12, %17 : vector<4x160xf32>
    %19 = arith.mulf %18, %18 : vector<4x160xf32>
    %cst_19 = arith.constant dense<0.000000e+00> : vector<160xf32>
    %20 = vector.multi_reduction <add>, %19, %cst_19 [0] : vector<4x160xf32> to vector<160xf32>
    %21 = vector.shape_cast %20 : vector<160xf32> to vector<1x160xf32>
    %cst_20 = arith.constant 4.000000e+00 : f32
    %22 = vector.broadcast %cst_20 : f32 to vector<1x160xf32>
    %23 = arith.divf %21, %22 : vector<1x160xf32>
    %cst_21 = arith.constant 9.99999997E-7 : f32
    %24 = vector.broadcast %cst_21 : f32 to vector<1x160xf32>
    %25 = arith.addf %23, %24 : vector<1x160xf32>
    %26 = math.rsqrt %25 : vector<1x160xf32>
    %27 = vector.broadcast %26 : vector<1x160xf32> to vector<4x160xf32>
    %28 = arith.mulf %18, %27 : vector<4x160xf32>
    %29 = vector.broadcast %4 : vector<4x1xf32> to vector<4x160xf32>
    %30 = arith.mulf %28, %29 : vector<4x160xf32>
    %31 = vector.broadcast %5 : vector<4x1xf32> to vector<4x160xf32>
    %32 = arith.addf %30, %31 : vector<4x160xf32>
    %33 = arith.truncf %32 : vector<4x160xf32> to vector<4x160xbf16>
    %cst_22 = arith.constant dense<0.000000e+00> : vector<8x160xf32>
    %34 = tpu.matmul %6, %33, %cst_22 {dimension_numbers = #tpu.dot_dimension_numbers<[1], [0], [0], [1], [0, 0, 1, 1], [], []>} : vector<8x4xbf16>, vector<4x160xbf16>, vector<8x160xf32> -> vector<8x160xf32>
    %35 = vector.broadcast %7 : vector<8x1xf32> to vector<8x160xf32>
    %36 = arith.addf %34, %35 : vector<8x160xf32>
    %37 = tpu.iota {dimensions = array<i32: 1>} : vector<1x160xi32>
    %c16_i32 = arith.constant 16 : i32
    %38 = vector.broadcast %c16_i32 : i32 to vector<1x160xi32>
    %39 = arith.cmpi sge, %37, %38 : vector<1x160xi32>
    %c0_i32 = arith.constant 0 : i32
    %40 = arith.cmpi sgt, %arg1, %c0_i32 : i32
    %41 = vector.broadcast %40 : i1 to vector<1x160xi1>
    %42 = arith.ori %39, %41 : vector<1x160xi1>
    %c144_i32 = arith.constant 144 : i32
    %43 = vector.broadcast %c144_i32 : i32 to vector<1x160xi32>
    %44 = arith.cmpi slt, %37, %43 : vector<1x160xi32>
    %c1_i32 = arith.constant 1 : i32
    %45 = arith.cmpi slt, %arg1, %c1_i32 : i32
    %46 = vector.broadcast %45 : i1 to vector<1x160xi1>
    %47 = arith.ori %44, %46 : vector<1x160xi1>
    %48 = arith.andi %42, %47 : vector<1x160xi1>
    %cst_23 = arith.constant 0.000000e+00 : f32
    %49 = vector.shape_cast %48 : vector<1x160xi1> to vector<1x160xi1>
    %50 = vector.broadcast %49 : vector<1x160xi1> to vector<8x160xi1>
    %51 = vector.broadcast %cst_23 : f32 to vector<8x160xf32>
    %52 = arith.select %50, %36, %51 : vector<8x160xi1>, vector<8x160xf32>
    %cst_24 = arith.constant 0.000000e+00 : f32
    %53 = vector.broadcast %cst_24 : f32 to vector<8x1xf32>
    %54 = vector.extract_strided_slice %52 {offsets = [0, 0], sizes = [8, 159], strides = [1, 1]} : vector<8x160xf32> to vector<8x159xf32>
    %55 = tpu.concatenate %53, %54 in 1 : vector<8x1xf32>, vector<8x159xf32> -> vector<8x160xf32>
    %56 = vector.extract_strided_slice %52 {offsets = [0, 1], sizes = [8, 159], strides = [1, 1]} : vector<8x160xf32> to vector<8x159xf32>
    %57 = tpu.concatenate %56, %53 in 1 : vector<8x159xf32>, vector<8x1xf32> -> vector<8x160xf32>
    %cst_25 = arith.constant 0.000000e+00 : f32
    %58 = vector.broadcast %cst_25 : f32 to vector<8x128xf32>
    %cst_26 = arith.constant 0.000000e+00 : f32
    %59 = vector.broadcast %cst_26 : f32 to vector<8x128xf32>
    %cst_27 = arith.constant 0.000000e+00 : f32
    %60 = vector.broadcast %cst_27 : f32 to vector<8x128xf32>
    %61 = vector.extract_strided_slice %55 {offsets = [0, 0], sizes = [8, 128], strides = [1, 1]} : vector<8x160xf32> to vector<8x128xf32>
    %62 = vector.extract_strided_slice %8 {offsets = [0, 0], sizes = [8, 1], strides = [1, 1]} : vector<8x9xf32> to vector<8x1xf32>
    %63 = vector.broadcast %62 : vector<8x1xf32> to vector<8x128xf32>
    %64 = arith.mulf %61, %63 : vector<8x128xf32>
    %65 = arith.addf %58, %64 : vector<8x128xf32>
    %66 = vector.extract_strided_slice %52 {offsets = [0, 0], sizes = [8, 128], strides = [1, 1]} : vector<8x160xf32> to vector<8x128xf32>
    %67 = vector.extract_strided_slice %8 {offsets = [0, 1], sizes = [8, 1], strides = [1, 1]} : vector<8x9xf32> to vector<8x1xf32>
    %68 = vector.broadcast %67 : vector<8x1xf32> to vector<8x128xf32>
    %69 = arith.mulf %66, %68 : vector<8x128xf32>
    %70 = arith.addf %59, %69 : vector<8x128xf32>
    %71 = vector.extract_strided_slice %57 {offsets = [0, 0], sizes = [8, 128], strides = [1, 1]} : vector<8x160xf32> to vector<8x128xf32>
    %72 = vector.extract_strided_slice %8 {offsets = [0, 2], sizes = [8, 1], strides = [1, 1]} : vector<8x9xf32> to vector<8x1xf32>
    %73 = vector.broadcast %72 : vector<8x1xf32> to vector<8x128xf32>
    %74 = arith.mulf %71, %73 : vector<8x128xf32>
    %75 = arith.addf %60, %74 : vector<8x128xf32>
    %76 = vector.extract_strided_slice %55 {offsets = [0, 16], sizes = [8, 128], strides = [1, 1]} : vector<8x160xf32> to vector<8x128xf32>
    %77 = vector.extract_strided_slice %8 {offsets = [0, 3], sizes = [8, 1], strides = [1, 1]} : vector<8x9xf32> to vector<8x1xf32>
    %78 = vector.broadcast %77 : vector<8x1xf32> to vector<8x128xf32>
    %79 = arith.mulf %76, %78 : vector<8x128xf32>
    %80 = arith.addf %65, %79 : vector<8x128xf32>
    %81 = vector.extract_strided_slice %52 {offsets = [0, 16], sizes = [8, 128], strides = [1, 1]} : vector<8x160xf32> to vector<8x128xf32>
    %82 = vector.extract_strided_slice %8 {offsets = [0, 4], sizes = [8, 1], strides = [1, 1]} : vector<8x9xf32> to vector<8x1xf32>
    %83 = vector.broadcast %82 : vector<8x1xf32> to vector<8x128xf32>
    %84 = arith.mulf %81, %83 : vector<8x128xf32>
    %85 = arith.addf %70, %84 : vector<8x128xf32>
    %86 = vector.extract_strided_slice %57 {offsets = [0, 16], sizes = [8, 128], strides = [1, 1]} : vector<8x160xf32> to vector<8x128xf32>
    %87 = vector.extract_strided_slice %8 {offsets = [0, 5], sizes = [8, 1], strides = [1, 1]} : vector<8x9xf32> to vector<8x1xf32>
    %88 = vector.broadcast %87 : vector<8x1xf32> to vector<8x128xf32>
    %89 = arith.mulf %86, %88 : vector<8x128xf32>
    %90 = arith.addf %75, %89 : vector<8x128xf32>
    %91 = vector.extract_strided_slice %55 {offsets = [0, 32], sizes = [8, 128], strides = [1, 1]} : vector<8x160xf32> to vector<8x128xf32>
    %92 = vector.extract_strided_slice %8 {offsets = [0, 6], sizes = [8, 1], strides = [1, 1]} : vector<8x9xf32> to vector<8x1xf32>
    %93 = vector.broadcast %92 : vector<8x1xf32> to vector<8x128xf32>
    %94 = arith.mulf %91, %93 : vector<8x128xf32>
    %95 = arith.addf %80, %94 : vector<8x128xf32>
    %96 = vector.extract_strided_slice %52 {offsets = [0, 32], sizes = [8, 128], strides = [1, 1]} : vector<8x160xf32> to vector<8x128xf32>
    %97 = vector.extract_strided_slice %8 {offsets = [0, 7], sizes = [8, 1], strides = [1, 1]} : vector<8x9xf32> to vector<8x1xf32>
    %98 = vector.broadcast %97 : vector<8x1xf32> to vector<8x128xf32>
    %99 = arith.mulf %96, %98 : vector<8x128xf32>
    %100 = arith.addf %85, %99 : vector<8x128xf32>
    %101 = vector.extract_strided_slice %57 {offsets = [0, 32], sizes = [8, 128], strides = [1, 1]} : vector<8x160xf32> to vector<8x128xf32>
    %102 = vector.extract_strided_slice %8 {offsets = [0, 8], sizes = [8, 1], strides = [1, 1]} : vector<8x9xf32> to vector<8x1xf32>
    %103 = vector.broadcast %102 : vector<8x1xf32> to vector<8x128xf32>
    %104 = arith.mulf %101, %103 : vector<8x128xf32>
    %105 = arith.addf %90, %104 : vector<8x128xf32>
    %106 = tpu.iota {dimensions = array<i32: 1>} : vector<1x128xi32>
    %c16_i32_28 = arith.constant 16 : i32
    %c0_i32_29 = arith.constant 0 : i32
    %107 = arith.cmpi eq, %c16_i32_28, %c0_i32_29 : i32
    %c1_i32_30 = arith.constant 1 : i32
    %108 = arith.select %107, %c1_i32_30, %c16_i32_28 : i32
    %109 = vector.broadcast %108 : i32 to vector<1x128xi32>
    %110 = arith.remsi %106, %109 : vector<1x128xi32>
    %c0_i32_31 = arith.constant 0 : i32
    %111 = vector.broadcast %c0_i32_31 : i32 to vector<1x128xi32>
    %112 = arith.cmpi ne, %110, %111 : vector<1x128xi32>
    %c0_i32_32 = arith.constant 0 : i32
    %113 = vector.broadcast %c0_i32_32 : i32 to vector<1x128xi32>
    %114 = arith.cmpi slt, %110, %113 : vector<1x128xi32>
    %c0_i32_33 = arith.constant 0 : i32
    %115 = arith.cmpi slt, %108, %c0_i32_33 : i32
    %116 = vector.broadcast %115 : i1 to vector<1x128xi1>
    %117 = vector.broadcast %116 : vector<1x128xi1> to vector<1x128xi1>
    %118 = arith.xori %114, %117 : vector<1x128xi1>
    %119 = arith.andi %118, %112 : vector<1x128xi1>
    %120 = vector.broadcast %108 : i32 to vector<1x128xi32>
    %121 = arith.addi %110, %120 : vector<1x128xi32>
    %122 = arith.select %119, %121, %110 : vector<1x128xi1>, vector<1x128xi32>
    %c0_i32_34 = arith.constant 0 : i32
    %123 = vector.broadcast %c0_i32_34 : i32 to vector<1x128xi32>
    %124 = arith.cmpi ne, %122, %123 : vector<1x128xi32>
    %cst_35 = arith.constant 0.000000e+00 : f32
    %125 = vector.shape_cast %124 : vector<1x128xi1> to vector<1x128xi1>
    %126 = vector.broadcast %125 : vector<1x128xi1> to vector<8x128xi1>
    %127 = vector.broadcast %cst_35 : f32 to vector<8x128xf32>
    %128 = arith.select %126, %95, %127 : vector<8x128xi1>, vector<8x128xf32>
    %129 = arith.addf %128, %100 : vector<8x128xf32>
    %c15_i32 = arith.constant 15 : i32
    %130 = vector.broadcast %c15_i32 : i32 to vector<1x128xi32>
    %131 = arith.cmpi ne, %122, %130 : vector<1x128xi32>
    %cst_36 = arith.constant 0.000000e+00 : f32
    %132 = vector.shape_cast %131 : vector<1x128xi1> to vector<1x128xi1>
    %133 = vector.broadcast %132 : vector<1x128xi1> to vector<8x128xi1>
    %134 = vector.broadcast %cst_36 : f32 to vector<8x128xf32>
    %135 = arith.select %133, %105, %134 : vector<8x128xi1>, vector<8x128xf32>
    %136 = arith.addf %129, %135 : vector<8x128xf32>
    %137 = vector.broadcast %9 : vector<8x1xf32> to vector<8x128xf32>
    %138 = arith.addf %136, %137 : vector<8x128xf32>
    %139 = vector.extract_strided_slice %138 {offsets = [0, 0], sizes = [4, 128], strides = [1, 1]} : vector<8x128xf32> to vector<4x128xf32>
    %140 = vector.extract_strided_slice %138 {offsets = [4, 0], sizes = [4, 128], strides = [1, 1]} : vector<8x128xf32> to vector<4x128xf32>
    %141 = arith.mulf %139, %140 : vector<4x128xf32>
    %c0_37 = arith.constant 0 : index
    %c0_38 = arith.constant 0 : index
    %c0_39 = arith.constant 0 : index
    %142 = vector.load %arg4[%c0_37, %c0_38, %c0_39] : memref<1x4x1xf32, #tpu.memory_space<vmem>>, vector<1x4x1xf32>
    %143 = vector.shape_cast %142 : vector<1x4x1xf32> to vector<4x1xf32>
    %144 = vector.broadcast %143 : vector<4x1xf32> to vector<4x128xf32>
    %145 = arith.mulf %141, %144 : vector<4x128xf32>
    %c0_40 = arith.constant 0 : index
    %c0_41 = arith.constant 0 : index
    %146 = vector.load %arg11[%c0_40, %c0_41] : memref<4x4xbf16, #tpu.memory_space<vmem>>, vector<4x4xbf16>
    %147 = arith.truncf %145 : vector<4x128xf32> to vector<4x128xbf16>
    %cst_42 = arith.constant dense<0.000000e+00> : vector<4x128xf32>
    %148 = tpu.matmul %146, %147, %cst_42 {dimension_numbers = #tpu.dot_dimension_numbers<[1], [0], [0], [1], [0, 0, 1, 1], [], []>} : vector<4x4xbf16>, vector<4x128xbf16>, vector<4x128xf32> -> vector<4x128xf32>
    %c0_43 = arith.constant 0 : index
    %c0_44 = arith.constant 0 : index
    %149 = vector.load %arg12[%c0_43, %c0_44] : memref<4x1xf32, #tpu.memory_space<vmem>>, vector<4x1xf32>
    %150 = vector.broadcast %149 : vector<4x1xf32> to vector<4x128xf32>
    %151 = arith.addf %148, %150 : vector<4x128xf32>
    %c0_45 = arith.constant 0 : index
    %c0_46 = arith.constant 0 : index
    %152 = vector.load %arg13[%c0_45, %c0_46] : memref<4x1xf32, #tpu.memory_space<vmem>>, vector<4x1xf32>
    %153 = vector.broadcast %152 : vector<4x1xf32> to vector<4x128xf32>
    %154 = arith.mulf %151, %153 : vector<4x128xf32>
    %155 = arith.addf %154, %1 : vector<4x128xf32>
    %cst_47 = arith.constant dense<0.000000e+00> : vector<128xf32>
    %156 = vector.multi_reduction <add>, %155, %cst_47 [0] : vector<4x128xf32> to vector<128xf32>
    %157 = vector.shape_cast %156 : vector<128xf32> to vector<1x128xf32>
    %cst_48 = arith.constant 4.000000e+00 : f32
    %158 = vector.broadcast %cst_48 : f32 to vector<1x128xf32>
    %159 = arith.divf %157, %158 : vector<1x128xf32>
    %160 = vector.broadcast %159 : vector<1x128xf32> to vector<4x128xf32>
    %161 = arith.subf %155, %160 : vector<4x128xf32>
    %162 = arith.mulf %161, %161 : vector<4x128xf32>
    %cst_49 = arith.constant dense<0.000000e+00> : vector<128xf32>
    %163 = vector.multi_reduction <add>, %162, %cst_49 [0] : vector<4x128xf32> to vector<128xf32>
    %164 = vector.shape_cast %163 : vector<128xf32> to vector<1x128xf32>
    %cst_50 = arith.constant 4.000000e+00 : f32
    %165 = vector.broadcast %cst_50 : f32 to vector<1x128xf32>
    %166 = arith.divf %164, %165 : vector<1x128xf32>
    %cst_51 = arith.constant 9.99999997E-7 : f32
    %167 = vector.broadcast %cst_51 : f32 to vector<1x128xf32>
    %168 = arith.addf %166, %167 : vector<1x128xf32>
    %169 = math.rsqrt %168 : vector<1x128xf32>
    %170 = vector.broadcast %169 : vector<1x128xf32> to vector<4x128xf32>
    %171 = arith.mulf %161, %170 : vector<4x128xf32>
    %c0_52 = arith.constant 0 : index
    %c0_53 = arith.constant 0 : index
    %172 = vector.load %arg14[%c0_52, %c0_53] : memref<4x1xf32, #tpu.memory_space<vmem>>, vector<4x1xf32>
    %173 = vector.broadcast %172 : vector<4x1xf32> to vector<4x128xf32>
    %174 = arith.mulf %171, %173 : vector<4x128xf32>
    %c0_54 = arith.constant 0 : index
    %c0_55 = arith.constant 0 : index
    %175 = vector.load %arg15[%c0_54, %c0_55] : memref<4x1xf32, #tpu.memory_space<vmem>>, vector<4x1xf32>
    %176 = vector.broadcast %175 : vector<4x1xf32> to vector<4x128xf32>
    %177 = arith.addf %174, %176 : vector<4x128xf32>
    %178 = arith.truncf %177 : vector<4x128xf32> to vector<4x128xbf16>
    %c0_56 = arith.constant 0 : index
    %c0_57 = arith.constant 0 : index
    %179 = vector.load %arg16[%c0_56, %c0_57] : memref<8x4xbf16, #tpu.memory_space<vmem>>, vector<8x4xbf16>
    %cst_58 = arith.constant dense<0.000000e+00> : vector<8x128xf32>
    %180 = tpu.matmul %179, %178, %cst_58 {dimension_numbers = #tpu.dot_dimension_numbers<[1], [0], [0], [1], [0, 0, 1, 1], [], []>} : vector<8x4xbf16>, vector<4x128xbf16>, vector<8x128xf32> -> vector<8x128xf32>
    %c0_59 = arith.constant 0 : index
    %c0_60 = arith.constant 0 : index
    %181 = vector.load %arg17[%c0_59, %c0_60] : memref<8x1xf32, #tpu.memory_space<vmem>>, vector<8x1xf32>
    %182 = vector.broadcast %181 : vector<8x1xf32> to vector<8x128xf32>
    %183 = arith.addf %180, %182 : vector<8x128xf32>
    %184 = vector.extract_strided_slice %183 {offsets = [0, 0], sizes = [4, 128], strides = [1, 1]} : vector<8x128xf32> to vector<4x128xf32>
    %185 = vector.extract_strided_slice %183 {offsets = [4, 0], sizes = [4, 128], strides = [1, 1]} : vector<8x128xf32> to vector<4x128xf32>
    %186 = arith.mulf %184, %185 : vector<4x128xf32>
    %c0_61 = arith.constant 0 : index
    %c0_62 = arith.constant 0 : index
    %187 = vector.load %arg18[%c0_61, %c0_62] : memref<4x4xbf16, #tpu.memory_space<vmem>>, vector<4x4xbf16>
    %188 = arith.truncf %186 : vector<4x128xf32> to vector<4x128xbf16>
    %cst_63 = arith.constant dense<0.000000e+00> : vector<4x128xf32>
    %189 = tpu.matmul %187, %188, %cst_63 {dimension_numbers = #tpu.dot_dimension_numbers<[1], [0], [0], [1], [0, 0, 1, 1], [], []>} : vector<4x4xbf16>, vector<4x128xbf16>, vector<4x128xf32> -> vector<4x128xf32>
    %c0_64 = arith.constant 0 : index
    %c0_65 = arith.constant 0 : index
    %190 = vector.load %arg19[%c0_64, %c0_65] : memref<4x1xf32, #tpu.memory_space<vmem>>, vector<4x1xf32>
    %191 = vector.broadcast %190 : vector<4x1xf32> to vector<4x128xf32>
    %192 = arith.addf %189, %191 : vector<4x128xf32>
    %c0_66 = arith.constant 0 : index
    %c0_67 = arith.constant 0 : index
    %193 = vector.load %arg20[%c0_66, %c0_67] : memref<4x1xf32, #tpu.memory_space<vmem>>, vector<4x1xf32>
    %194 = vector.broadcast %193 : vector<4x1xf32> to vector<4x128xf32>
    %195 = arith.mulf %192, %194 : vector<4x128xf32>
    %196 = arith.addf %195, %155 : vector<4x128xf32>
    %c0_68 = arith.constant 0 : index
    %c0_69 = arith.constant 0 : index
    %c0_70 = arith.constant 0 : index
    %197 = vector.load %arg21[%c0_68, %c0_69, %c0_70] : memref<1x4x128xf32, #tpu.memory_space<vmem>>, vector<1x4x128xf32>
    %198 = vector.shape_cast %197 : vector<1x4x128xf32> to vector<4x128xf32>
    %199 = vector.shape_cast %196 : vector<4x128xf32> to vector<1x4x128xf32>
    tpu.vector_store %arg21[%c0_68, %c0_69, %c0_70], %199 {strides = array<i32>} : memref<1x4x128xf32, #tpu.memory_space<vmem>>, vector<1x4x128xf32>,
    return
  }
  func.func @transform_0(%arg0: i32, %arg1: i32) -> (i32, i32, i32) {
    %c0_i32 = arith.constant 0 : i32
    %c0_i32_0 = arith.constant 0 : i32
    return %arg0, %c0_i32, %arg1 : i32, i32, i32
  }
  func.func @transform_1(%arg0: i32, %arg1: i32) -> (i32, i32, i32, i32) {
    %c0_i32 = arith.constant 0 : i32
    %c0_i32_0 = arith.constant 0 : i32
    %c0_i32_1 = arith.constant 0 : i32
    return %arg0, %arg1, %c0_i32, %c0_i32_0 : i32, i32, i32, i32
  }
  func.func @transform_2(%arg0: i32, %arg1: i32) -> (i32, i32, i32) {
    %c0_i32 = arith.constant 0 : i32
    %c0_i32_0 = arith.constant 0 : i32
    %c0_i32_1 = arith.constant 0 : i32
    return %arg0, %c0_i32, %c0_i32_0 : i32, i32, i32
  }
  func.func @transform_3(%arg0: i32, %arg1: i32) -> (i32, i32) {
    %c0_i32 = arith.constant 0 : i32
    %c0_i32_0 = arith.constant 0 : i32
    %c0_i32_1 = arith.constant 0 : i32
    return %c0_i32, %c0_i32_0 : i32, i32
  }
  func.func @transform_4(%arg0: i32, %arg1: i32) -> (i32, i32) {
    %c0_i32 = arith.constant 0 : i32
    %c0_i32_0 = arith.constant 0 : i32
    %c0_i32_1 = arith.constant 0 : i32
    return %c0_i32, %c0_i32_0 : i32, i32
  }
  func.func @transform_5(%arg0: i32, %arg1: i32) -> (i32, i32) {
    %c0_i32 = arith.constant 0 : i32
    %c0_i32_0 = arith.constant 0 : i32
    %c0_i32_1 = arith.constant 0 : i32
    return %c0_i32, %c0_i32_0 : i32, i32
  }
  func.func @transform_6(%arg0: i32, %arg1: i32) -> (i32, i32) {
    %c0_i32 = arith.constant 0 : i32
    %c0_i32_0 = arith.constant 0 : i32
    %c0_i32_1 = arith.constant 0 : i32
    return %c0_i32, %c0_i32_0 : i32, i32
  }
  func.func @transform_7(%arg0: i32, %arg1: i32) -> (i32, i32) {
    %c0_i32 = arith.constant 0 : i32
    %c0_i32_0 = arith.constant 0 : i32
    %c0_i32_1 = arith.constant 0 : i32
    return %c0_i32, %c0_i32_0 : i32, i32
  }
  func.func @transform_8(%arg0: i32, %arg1: i32) -> (i32, i32) {
    %c0_i32 = arith.constant 0 : i32
    %c0_i32_0 = arith.constant 0 : i32
    %c0_i32_1 = arith.constant 0 : i32
    return %c0_i32, %c0_i32_0 : i32, i32
  }
  func.func @transform_9(%arg0: i32, %arg1: i32) -> (i32, i32) {
    %c0_i32 = arith.constant 0 : i32
    %c0_i32_0 = arith.constant 0 : i32
    %c0_i32_1 = arith.constant 0 : i32
    return %c0_i32, %c0_i32_0 : i32, i32
  }
  func.func @transform_10(%arg0: i32, %arg1: i32) -> (i32, i32) {
    %c0_i32 = arith.constant 0 : i32
    %c0_i32_0 = arith.constant 0 : i32
    %c0_i32_1 = arith.constant 0 : i32
    return %c0_i32, %c0_i32_0 : i32, i32
  }
  func.func @transform_11(%arg0: i32, %arg1: i32) -> (i32, i32) {
    %c0_i32 = arith.constant 0 : i32
    %c0_i32_0 = arith.constant 0 : i32
    %c0_i32_1 = arith.constant 0 : i32
    return %c0_i32, %c0_i32_0 : i32, i32
  }
  func.func @transform_12(%arg0: i32, %arg1: i32) -> (i32, i32) {
    %c0_i32 = arith.constant 0 : i32
    %c0_i32_0 = arith.constant 0 : i32
    %c0_i32_1 = arith.constant 0 : i32
    return %c0_i32, %c0_i32_0 : i32, i32
  }
  func.func @transform_13(%arg0: i32, %arg1: i32) -> (i32, i32) {
    %c0_i32 = arith.constant 0 : i32
    %c0_i32_0 = arith.constant 0 : i32
    %c0_i32_1 = arith.constant 0 : i32
    return %c0_i32, %c0_i32_0 : i32, i32
  }
  func.func @transform_14(%arg0: i32, %arg1: i32) -> (i32, i32) {
    %c0_i32 = arith.constant 0 : i32
    %c0_i32_0 = arith.constant 0 : i32
    %c0_i32_1 = arith.constant 0 : i32
    return %c0_i32, %c0_i32_0 : i32, i32
  }
  func.func @transform_15(%arg0: i32, %arg1: i32) -> (i32, i32) {
    %c0_i32 = arith.constant 0 : i32
    %c0_i32_0 = arith.constant 0 : i32
    %c0_i32_1 = arith.constant 0 : i32
    return %c0_i32, %c0_i32_0 : i32, i32
  }
  func.func @transform_16(%arg0: i32, %arg1: i32) -> (i32, i32) {
    %c0_i32 = arith.constant 0 : i32
    %c0_i32_0 = arith.constant 0 : i32
    %c0_i32_1 = arith.constant 0 : i32
    return %c0_i32, %c0_i32_0 : i32, i32
  }
  func.func @transform_17(%arg0: i32, %arg1: i32) -> (i32, i32) {
    %c0_i32 = arith.constant 0 : i32
    %c0_i32_0 = arith.constant 0 : i32
    %c0_i32_1 = arith.constant 0 : i32
    return %c0_i32, %c0_i32_0 : i32, i32
  }
  func.func @transform_18(%arg0: i32, %arg1: i32) -> (i32, i32) {
    %c0_i32 = arith.constant 0 : i32
    %c0_i32_0 = arith.constant 0 : i32
    %c0_i32_1 = arith.constant 0 : i32
    return %c0_i32, %c0_i32_0 : i32, i32
  }
  func.func @transform_19(%arg0: i32, %arg1: i32) -> (i32, i32, i32) {
    %c0_i32 = arith.constant 0 : i32
    %c0_i32_0 = arith.constant 0 : i32
    return %arg0, %c0_i32, %arg1 : i32, i32, i32
  }
}

</mosaic_0001>

<llo_original>
// kernel: nafnet_block.2
$region0: #{nafnet_block.2}
  #allocation0 [shape = 'u32[]', space=smem, size = 0x4, offset = 0x4, fixed_abs, tag = 'smem constant byte address 0x4 - core index']
  #allocation1 [shape = 'u32[144,128]{1,0:T(1,128)}', space=vmem, size = 0x12000, scoped, tag = 'internal scratch']
  %s0 = inlined_call_operand.vmem [shape: f32[2,4,256], index: 0, kind: input, shape index: {}]
  %s1 = inlined_call_operand.vmem [shape: f32[2,2,4,32], index: 1, kind: input, shape index: {}]
  %s2 = inlined_call_operand.vmem [shape: f32[4,1], index: 2, kind: input, shape index: {}]
  %s3 = inlined_call_operand.vmem [shape: f32[4,1], index: 3, kind: input, shape index: {}]
  %s4 = inlined_call_operand.vmem [shape: bf16[8,4], index: 4, kind: input, shape index: {}]
  %s5 = inlined_call_operand.vmem [shape: f32[8,1], index: 5, kind: input, shape index: {}]
  %s6 = inlined_call_operand.vmem [shape: f32[8,9], index: 6, kind: input, shape index: {}]
  %s7 = inlined_call_operand.vmem [shape: f32[8,1], index: 7, kind: input, shape index: {}]
  %s8 = inlined_call_operand.vmem [shape: f32[2,2,4,1], index: 8, kind: output, shape index: {}]
  %s9 = sld [smem:[#allocation0]]
  $region65: #{nafnet_block.2} parent=0
    _
  %s11 = ssub.s32 1, %s9
  %s12 = scalar_select 0, %s11, %s9
  loop: start=0, step=1, limit=6
  $region2: #{nafnet_block.2} parent=0 // loop_pre_header
    _
  $region3: #{nafnet_block.2} parent=0 // loop_header
    %s14 = sphi 0, %s18
    %p15 = scmp.ge.s32.totalorder %s14, 6
    %s21 = sphi 0, %s33
    %s22 = sphi 0, %s29
    %s23 = sphi 0, %s21
    %s24 = sphi 0, %s22
    %s25 = sphi 0, %s23
    %s26 = sphi 0, %s24
    %s38 = sphi 0, %s40
    %s41 = sphi 0, %s38
    %s42 = sphi 0, %s41
    %s58 = sphi 0, %s42
    %s66 = sphi 0, %s68
    %s69 = sphi 0, %s66
    %s70 = sphi 0, %s69
    %s86 = sphi 0, %s70
    %s90 = sphi 0, %s90
    %s92 = sphi 0, %s90
    %s93 = sphi 0, %s92
    %s107 = sphi 0, %s93
    %s111 = sphi 0, %s111
    %s113 = sphi 0, %s111
    %s114 = sphi 0, %s113
    %s128 = sphi 0, %s114
    %s132 = sphi 0, %s132
    %s134 = sphi 0, %s132
    %s135 = sphi 0, %s134
    %s149 = sphi 0, %s135
    %s153 = sphi 0, %s153
    %s155 = sphi 0, %s153
    %s156 = sphi 0, %s155
    %s170 = sphi 0, %s156
    %s174 = sphi 0, %s174
    %s176 = sphi 0, %s174
    %s177 = sphi 0, %s176
    %s191 = sphi 0, %s177
    %s195 = sphi 0, %s195
    %s197 = sphi 0, %s195
    %s198 = sphi 0, %s197
    %s212 = sphi 0, %s198
    %s220 = sphi 0, %s222
    %s223 = sphi 0, %s220
    %s224 = sphi 0, %s223
    %s240 = sphi 0, %s224
  $region4: #{nafnet_block.2} parent=0 // loop_header_branch
    %17 = sbr.rel (%p15) target = $region8
  $region5: #{nafnet_block.2} parent=0 // loop_body
    %s19 = ssub.s32 %s14, 1
    %s20 = ssub.s32 %s14, 2
    %s27 = sadd.s32 1, %s22
    %p28 = scmp.ge.s32.totalorder %s27, 2
    %s29 = scalar_select %p28, 0, %s27
    %s30 = sadd.s32 1, %s21
    %s31 = scalar_select %p28, %s30, %s21
    %p32 = scmp.ge.s32.totalorder %s31, 2
    %s33 = scalar_select %p32, 0, %s31
    %s34 = ssub.s32 %s21, %s33
    %s35 = ssub.s32 %s22, %s29
    %s36 = sor.u32 %s34, %s35
    %p37 = scmp.eq.s32.totalorder %s36, 0
    %s39 = sadd.s32 %s38, 1
    %s40 = scalar_select %p37, %s38, %s39
    %p43 = pneg %p37
    %p44 = scmp.eq.s32.totalorder %s14, 3
    %p45 = por %p43, %p44
    %p46 = scmp.ne.s32.totalorder %s38, %s41
    %p47 = scmp.eq.s32.totalorder %s14, 0
    %p48 = por %p46, %p47
    %p49 = scmp.ne.s32.totalorder %s38, %s41
    %p50 = scmp.eq.s32.totalorder %s19, 3
    %p51 = por %p49, %p50
    %p52 = scmp.ne.s32.totalorder %s41, %s42
    %p53 = scmp.eq.s32.totalorder %s19, 0
    %p54 = por %p52, %p53
    %p55 = scmp.ne.s32.totalorder %s41, %s42
    %p56 = scmp.eq.s32.totalorder %s20, 3
    %p57 = por %p55, %p56
    %p59 = scmp.ne.s32.totalorder %s42, %s58
    %p60 = scmp.eq.s32.totalorder %s20, 0
    %p61 = por %p59, %p60
    %s62 = ssub.s32 %s21, %s33
    %s63 = ssub.s32 %s22, %s29
    %s64 = sor.u32 %s62, %s63
    %p65 = scmp.eq.s32.totalorder %s64, 0
    %s67 = sadd.s32 %s66, 1
    %s68 = scalar_select %p65, %s66, %s67
    %p71 = pneg %p65
    %p72 = scmp.eq.s32.totalorder %s14, 3
    %p73 = por %p71, %p72
    %p74 = scmp.ne.s32.totalorder %s66, %s69
    %p75 = scmp.eq.s32.totalorder %s14, 0
    %p76 = por %p74, %p75
    %p77 = scmp.ne.s32.totalorder %s66, %s69
    %p78 = scmp.eq.s32.totalorder %s19, 3
    %p79 = por %p77, %p78
    %p80 = scmp.ne.s32.totalorder %s69, %s70
    %p81 = scmp.eq.s32.totalorder %s19, 0
    %p82 = por %p80, %p81
    %p83 = scmp.ne.s32.totalorder %s69, %s70
    %p84 = scmp.eq.s32.totalorder %s20, 3
    %p85 = por %p83, %p84
    %p87 = scmp.ne.s32.totalorder %s70, %s86
    %p88 = scmp.eq.s32.totalorder %s20, 0
    %p89 = por %p87, %p88
    %s91 = sadd.s32 %s90, 1
    %p94 = scmp.eq.s32.totalorder %s14, 3
    %p95 = scmp.ne.s32.totalorder %s90, %s92
    %p96 = scmp.eq.s32.totalorder %s14, 0
    %p97 = por %p95, %p96
    %p98 = scmp.ne.s32.totalorder %s90, %s92
    %p99 = scmp.eq.s32.totalorder %s19, 3
    %p100 = por %p98, %p99
    %p101 = scmp.ne.s32.totalorder %s92, %s93
    %p102 = scmp.eq.s32.totalorder %s19, 0
    %p103 = por %p101, %p102
    %p104 = scmp.ne.s32.totalorder %s92, %s93
    %p105 = scmp.eq.s32.totalorder %s20, 3
    %p106 = por %p104, %p105
    %p108 = scmp.ne.s32.totalorder %s93, %s107
    %p109 = scmp.eq.s32.totalorder %s20, 0
    %p110 = por %p108, %p109
    %s112 = sadd.s32 %s111, 1
    %p115 = scmp.eq.s32.totalorder %s14, 3
    %p116 = scmp.ne.s32.totalorder %s111, %s113
    %p117 = scmp.eq.s32.totalorder %s14, 0
    %p118 = por %p116, %p117
    %p119 = scmp.ne.s32.totalorder %s111, %s113
    %p120 = scmp.eq.s32.totalorder %s19, 3
    %p121 = por %p119, %p120
    %p122 = scmp.ne.s32.totalorder %s113, %s114
    %p123 = scmp.eq.s32.totalorder %s19, 0
    %p124 = por %p122, %p123
    %p125 = scmp.ne.s32.totalorder %s113, %s114
    %p126 = scmp.eq.s32.totalorder %s20, 3
    %p127 = por %p125, %p126
    %p129 = scmp.ne.s32.totalorder %s114, %s128
    %p130 = scmp.eq.s32.totalorder %s20, 0
    %p131 = por %p129, %p130
    %s133 = sadd.s32 %s132, 1
    %p136 = scmp.eq.s32.totalorder %s14, 3
    %p137 = scmp.ne.s32.totalorder %s132, %s134
    %p138 = scmp.eq.s32.totalorder %s14, 0
    %p139 = por %p137, %p138
    %p140 = scmp.ne.s32.totalorder %s132, %s134
    %p141 = scmp.eq.s32.totalorder %s19, 3
    %p142 = por %p140, %p141
    %p143 = scmp.ne.s32.totalorder %s134, %s135
    %p144 = scmp.eq.s32.totalorder %s19, 0
    %p145 = por %p143, %p144
    %p146 = scmp.ne.s32.totalorder %s134, %s135
    %p147 = scmp.eq.s32.totalorder %s20, 3
    %p148 = por %p146, %p147
    %p150 = scmp.ne.s32.totalorder %s135, %s149
    %p151 = scmp.eq.s32.totalorder %s20, 0
    %p152 = por %p150, %p151
    %s154 = sadd.s32 %s153, 1
    %p157 = scmp.eq.s32.totalorder %s14, 3
    %p158 = scmp.ne.s32.totalorder %s153, %s155
    %p159 = scmp.eq.s32.totalorder %s14, 0
    %p160 = por %p158, %p159
    %p161 = scmp.ne.s32.totalorder %s153, %s155
    %p162 = scmp.eq.s32.totalorder %s19, 3
    %p163 = por %p161, %p162
    %p164 = scmp.ne.s32.totalorder %s155, %s156
    %p165 = scmp.eq.s32.totalorder %s19, 0
    %p166 = por %p164, %p165
    %p167 = scmp.ne.s32.totalorder %s155, %s156
    %p168 = scmp.eq.s32.totalorder %s20, 3
    %p169 = por %p167, %p168
    %p171 = scmp.ne.s32.totalorder %s156, %s170
    %p172 = scmp.eq.s32.totalorder %s20, 0
    %p173 = por %p171, %p172
    %s175 = sadd.s32 %s174, 1
    %p178 = scmp.eq.s32.totalorder %s14, 3
    %p179 = scmp.ne.s32.totalorder %s174, %s176
    %p180 = scmp.eq.s32.totalorder %s14, 0
    %p181 = por %p179, %p180
    %p182 = scmp.ne.s32.totalorder %s174, %s176
    %p183 = scmp.eq.s32.totalorder %s19, 3
    %p184 = por %p182, %p183
    %p185 = scmp.ne.s32.totalorder %s176, %s177
    %p186 = scmp.eq.s32.totalorder %s19, 0
    %p187 = por %p185, %p186
    %p188 = scmp.ne.s32.totalorder %s176, %s177
    %p189 = scmp.eq.s32.totalorder %s20, 3
    %p190 = por %p188, %p189
    %p192 = scmp.ne.s32.totalorder %s177, %s191
    %p193 = scmp.eq.s32.totalorder %s20, 0
    %p194 = por %p192, %p193
    %s196 = sadd.s32 %s195, 1
    %p199 = scmp.eq.s32.totalorder %s14, 3
    %p200 = scmp.ne.s32.totalorder %s195, %s197
    %p201 = scmp.eq.s32.totalorder %s14, 0
    %p202 = por %p200, %p201
    %p203 = scmp.ne.s32.totalorder %s195, %s197
    %p204 = scmp.eq.s32.totalorder %s19, 3
    %p205 = por %p203, %p204
    %p206 = scmp.ne.s32.totalorder %s197, %s198
    %p207 = scmp.eq.s32.totalorder %s19, 0
    %p208 = por %p206, %p207
    %p209 = scmp.ne.s32.totalorder %s197, %s198
    %p210 = scmp.eq.s32.totalorder %s20, 3
    %p211 = por %p209, %p210
    %p213 = scmp.ne.s32.totalorder %s198, %s212
    %p214 = scmp.eq.s32.totalorder %s20, 0
    %p215 = por %p213, %p214
    %s216 = ssub.s32 %s21, %s33
    %s217 = ssub.s32 %s22, %s29
    %s218 = sor.u32 %s216, %s217
    %p219 = scmp.eq.s32.totalorder %s218, 0
    %s221 = sadd.s32 %s220, 1
    %s222 = scalar_select %p219, %s220, %s221
    %p225 = pneg %p219
    %p226 = scmp.eq.s32.totalorder %s14, 3
    %p227 = por %p225, %p226
    %p228 = scmp.ne.s32.totalorder %s220, %s223
    %p229 = scmp.eq.s32.totalorder %s14, 0
    %p230 = por %p228, %p229
    %p231 = scmp.ne.s32.totalorder %s220, %s223
    %p232 = scmp.eq.s32.totalorder %s19, 3
    %p233 = por %p231, %p232
    %p234 = scmp.ne.s32.totalorder %s223, %s224
    %p235 = scmp.eq.s32.totalorder %s19, 0
    %p236 = por %p234, %p235
    %p237 = scmp.ne.s32.totalorder %s223, %s224
    %p238 = scmp.eq.s32.totalorder %s20, 3
    %p239 = por %p237, %p238
    %p241 = scmp.ne.s32.totalorder %s224, %s240
    %p242 = scmp.eq.s32.totalorder %s20, 0
    %p243 = por %p241, %p242
    %p244 = scmp.le.s32.totalorder 1, %s14
    %p245 = scmp.lt.s32.totalorder %s14, 5
    %p246 = pnand %p244, %p245
    %p247 = pneg %p246
    // Predicated region
    $region9: #{nafnet_block.2} parent=5 // pred_check
      _
    $region10: #{nafnet_block.2} parent=5 // pred_check_branch
      %249 = sbr.rel (%p246) target = $region12
    $region11: #{nafnet_block.2} parent=5 // pred_region
      %s250 = ssub.s32 %s14, 1
      // Predicated region
      $region13: #{nafnet_block.2} parent=11 // pred_check
        %p251 = pneg %p103
      $region14: #{nafnet_block.2} parent=11 // pred_check_branch
        %253 = sbr.rel (%p251) target = $region16
      $region15: #{nafnet_block.2} parent=11 // pred_region
        _
      $region16: #{nafnet_block.2} parent=11 // pred_fallthru
        _
      // Predicated region
      $region17: #{nafnet_block.2} parent=11 // pred_check
        %p254 = pneg %p124
      $region18: #{nafnet_block.2} parent=11 // pred_check_branch
        %256 = sbr.rel (%p254) target = $region20
      $region19: #{nafnet_block.2} parent=11 // pred_region
        _
      $region20: #{nafnet_block.2} parent=11 // pred_fallthru
        _
      // Predicated region
      $region21: #{nafnet_block.2} parent=11 // pred_check
        %p257 = pneg %p145
      $region22: #{nafnet_block.2} parent=11 // pred_check_branch
        %259 = sbr.rel (%p257) target = $region24
      $region23: #{nafnet_block.2} parent=11 // pred_region
        _
      $region24: #{nafnet_block.2} parent=11 // pred_fallthru
        _
      // Predicated region
      $region25: #{nafnet_block.2} parent=11 // pred_check
        %p260 = pneg %p166
      $region26: #{nafnet_block.2} parent=11 // pred_check_branch
        %262 = sbr.rel (%p260) target = $region28
      $region27: #{nafnet_block.2} parent=11 // pred_region
        _
      $region28: #{nafnet_block.2} parent=11 // pred_fallthru
        _
      // Predicated region
      $region29: #{nafnet_block.2} parent=11 // pred_check
        %p263 = pneg %p187
      $region30: #{nafnet_block.2} parent=11 // pred_check_branch
        %265 = sbr.rel (%p263) target = $region32
      $region31: #{nafnet_block.2} parent=11 // pred_region
        _
      $region32: #{nafnet_block.2} parent=11 // pred_fallthru
        _
      // Predicated region
      $region33: #{nafnet_block.2} parent=11 // pred_check
        %p266 = pneg %p208
      $region34: #{nafnet_block.2} parent=11 // pred_check_branch
        %268 = sbr.rel (%p266) target = $region36
      $region35: #{nafnet_block.2} parent=11 // pred_region
        _
      $region36: #{nafnet_block.2} parent=11 // pred_fallthru
        _
    $region12: #{nafnet_block.2} parent=5 // pred_fallthru
      _
    %p269 = scmp.lt.s32.totalorder %s14, 4
    // Predicated region
    $region37: #{nafnet_block.2} parent=5 // pred_check
      %p270 = pneg %p269
    $region38: #{nafnet_block.2} parent=5 // pred_check_branch
      %272 = sbr.rel (%p270) target = $region40
    $region39: #{nafnet_block.2} parent=5 // pred_region
      // Predicated region
      $region41: #{nafnet_block.2} parent=39 // pred_check
        %p273 = pneg %p48
      $region42: #{nafnet_block.2} parent=39 // pred_check_branch
        %275 = sbr.rel (%p273) target = $region44
      $region43: #{nafnet_block.2} parent=39 // pred_region
        %p276 = scmp.lt.s32.totalorder %s21, 1
        %s277 = scalar_select %p276, %s21, 1
        %p278 = scmp.lt.s32.totalorder %s22, 1
        %s279 = scalar_select %p278, %s22, 1
        %s280 = smul.addr %s277, 2
        %s281 = sadd.s32 %s279, %s280
        %s282 = smul.addr %s281, 4
        %s283 = scalar_lea.vmem %s0, %s282
      $region44: #{nafnet_block.2} parent=39 // pred_fallthru
        _
      // Predicated region
      $region45: #{nafnet_block.2} parent=39 // pred_check
        %p284 = pneg %p76
      $region46: #{nafnet_block.2} parent=39 // pred_check_branch
        %286 = sbr.rel (%p284) target = $region48
      $region47: #{nafnet_block.2} parent=39 // pred_region
        %p287 = scmp.lt.s32.totalorder %s21, 1
        %s288 = scalar_select %p287, %s21, 1
        %p289 = scmp.lt.s32.totalorder %s22, 1
        %s290 = scalar_select %p289, %s22, 1
        %s291 = smul.addr %s288, 2
        %s292 = sadd.s32 %s290, %s291
        %s293 = smul.addr %s292, 4
        %s294 = scalar_lea.vmem %s1, %s293
      $region48: #{nafnet_block.2} parent=39 // pred_fallthru
        _
    $region40: #{nafnet_block.2} parent=5 // pred_fallthru
      _
    %p295 = scmp.le.s32.totalorder 1, %s14
    %p296 = scmp.lt.s32.totalorder %s14, 5
    %p297 = pnand %p295, %p296
    %p298 = pneg %p297
    // Predicated region
    $region49: #{nafnet_block.2} parent=5 // pred_check
      _
    $region50: #{nafnet_block.2} parent=5 // pred_check_branch
      %300 = sbr.rel (%p297) target = $region52
    $region51: #{nafnet_block.2} parent=5 // pred_region
      %s301 = ssub.s32 %s14, 1
      %p302 = scmp.lt.s32.totalorder %s23, 1
      %s303 = scalar_select %p302, %s23, 1
      %p304 = scmp.lt.s32.totalorder %s24, 1
      %s305 = scalar_select %p304, %s24, 1
      %s306 = smul.addr %s303, 2
      %s307 = sadd.s32 %s305, %s306
      %s308 = smul.addr %s307, 4
      %s309 = scalar_lea.vmem %s0, %s308
      %p310 = pneg %p54
      %p311 = pneg %p51
      %p312 = scmp.lt.s32.totalorder %s23, 1
      %s313 = scalar_select %p312, %s23, 1
      %p314 = scmp.lt.s32.totalorder %s24, 1
      %s315 = scalar_select %p314, %s24, 1
      %s316 = smul.addr %s313, 2
      %s317 = sadd.s32 %s315, %s316
      %s318 = smul.addr %s317, 4
      %s319 = scalar_lea.vmem %s1, %s318
      %p320 = pneg %p82
      %p321 = pneg %p79
      %p322 = pneg %p103
      %p323 = pneg %p100
      %p324 = pneg %p124
      %p325 = pneg %p121
      %p326 = pneg %p145
      %p327 = pneg %p142
      %p328 = pneg %p166
      %p329 = pneg %p163
      %p330 = pneg %p187
      %p331 = pneg %p184
      %p332 = pneg %p208
      %p333 = pneg %p205
      %p334 = pneg %p236
      %p335 = pneg %p233
      %p336 = scmp.lt.s32.totalorder %s23, 1
      %s337 = scalar_select %p336, %s23, 1
      %p338 = scmp.lt.s32.totalorder %s24, 1
      %s339 = scalar_select %p338, %s24, 1
      %s340 = smul.addr %s337, 2
      %s341 = sadd.s32 %s339, %s340
      %s342 = smul.addr %s341, 4
      %s343 = scalar_lea.vmem %s8, %s342
      %p344 = scmp.lt.s32.totalorder %s23, 1
      %s345 = scalar_select %p344, %s23, 1
      %p346 = scmp.lt.s32.totalorder %s24, 1
      %s347 = scalar_select %p346, %s24, 1
      %s348 = smul.addr %s345, 2
      %s349 = sadd.s32 %s347, %s348
      %s350 = smul.addr %s349, 4
      %s351 = scalar_lea.vmem %s0, %s350
      %p352 = scmp.lt.s32.totalorder %s23, 1
      %s353 = scalar_select %p352, %s23, 1
      %p354 = scmp.lt.s32.totalorder %s24, 1
      %s355 = scalar_select %p354, %s24, 1
      %s356 = smul.addr %s353, 2
      %s357 = sadd.s32 %s355, %s356
      %s358 = smul.addr %s357, 4
      %s359 = scalar_lea.vmem %s1, %s358
      %p360 = scmp.lt.s32.totalorder %s23, 1
      %s361 = scalar_select %p360, %s23, 1
      %p362 = scmp.lt.s32.totalorder %s24, 1
      %s363 = scalar_select %p362, %s24, 1
      %s364 = smul.addr %s361, 2
      %s365 = sadd.s32 %s363, %s364
      %s366 = smul.addr %s365, 4
      %s367 = scalar_lea.vmem %s8, %s366
      %v369 = vld [vmem:[%s351] sm:$0xf]
      %v370 = vld [vmem:[%s359] sm:$0xf]
      %v371 = vld [vmem:[%s2] sm:$0xf]
      %v372 = vld [vmem:[%s3] sm:$0xf]
      %v373 = vld [vmem:[%s4] sm:$0xf]
      %v374 = vld [vmem:[%s5] sm:$0xff]
      %v375 = vld [vmem:[%s6] sm:$0xff]
      %v376 = vld [vmem:[%s7] sm:$0xff]
      %378 = vrot.lane.b32.xlu0 %v369, 16
      %v379 = vpop.permute.xlu0 %378
      %vm381 = vcmask 130048
      %v382 = vsel %vm381, %v370, %v379
      %v383 = vsel %vm381, %v379, %v370
      %vm384 = vcmask 1043456
      %v385 = vsel %vm384, %v382, 0.0
      %v386 = vrot.slane %v385, 4
      %v387 = vadd.f32 %v385, %v386
      %v388 = vrot.slane %v387, 2
      %v389 = vadd.f32 %v387, %v388
      %v390 = vrot.slane %v389, 1
      %v391 = vadd.f32 %v389, %v390
      %vm392 = vcmask 257024
      %v393 = vsel %vm392, %v383, 0.0
      %v394 = vrot.slane %v393, 4
      %v395 = vadd.f32 %v393, %v394
      %v396 = vrot.slane %v395, 2
      %v397 = vadd.f32 %v395, %v396
      %v398 = vrot.slane %v397, 1
      %v399 = vadd.f32 %v397, %v398
      %v400 = vrcp.pop 4.0
      %v401 = vmul.f32 %v391, %v400
      %v402 = vmul.f32 %v399, %v400
      %v403 = vsub.f32 %v382, %v401
      %v404 = vsub.f32 %v383, %v402
      %v405 = vmul.f32 %v403, %v403
      %v406 = vmul.f32 %v404, %v404
      %v407 = vsel %vm384, %v405, 0.0
      %v408 = vrot.slane %v407, 4
      %v409 = vadd.f32 %v407, %v408
      %v410 = vrot.slane %v409, 2
      %v411 = vadd.f32 %v409, %v410
      %v412 = vrot.slane %v411, 1
      %v413 = vadd.f32 %v411, %v412
      %v414 = vsel %vm392, %v406, 0.0
      %v415 = vrot.slane %v414, 4
      %v416 = vadd.f32 %v414, %v415
      %v417 = vrot.slane %v416, 2
      %v418 = vadd.f32 %v416, %v417
      %v419 = vrot.slane %v418, 1
      %v420 = vadd.f32 %v418, %v419
      %v421 = vmul.f32 %v413, %v400
      %v422 = vmul.f32 %v420, %v400
      %v423 = vadd.f32 %v421, 1e-06
      %v424 = vadd.f32 %v422, 1e-06
      %v425 = vrsqrt.pop %v423
      %v426 = vrsqrt.pop %v424
      %v427 = vmul.f32 %v403, %v425
      %v428 = vmul.f32 %v404, %v426
      %430 = vset.pattern.permute.xlu0 0
      %431 = vperm.xlu0 %430, %v371
      %v432 = vpop.permute.xlu0 %431
      %v434 = vmul.f32 %v427, %v432
      %v435 = vmul.f32 %v428, %v432
      %437 = vset.pattern.permute.xlu0 0
      %438 = vperm.xlu0 %437, %v372
      %v439 = vpop.permute.xlu0 %438
      %v441 = vadd.f32 %v434, %v439
      %v442 = vadd.f32 %v435, %v439
      %v443 = vpack.c.bf16 %v441, %v441
      %v444 = vpack.c.bf16 %v442, %v442
      %446 = vset.pattern.permute.xlu0 0
      %447 = vperm.xlu0 %446, %v374
      %v448 = vpop.permute.xlu0 %447
      %vm450 = vcmask 31744
      %v452 = vsel %vm450, %v373, 0
      %vm454 = vcmask 1041408
      %v456 = vsel %vm454, %v443, 0
      %v459 = vsel %vm454, %v444, 0
      %461 = vmatprep.subr.bf16.mxu0 %v459
      %462 = vmatpush1.bf16.msra.mxu0 %v456
      %463 = vmatprep.subr.bf16.mxu0 0
      %464 = vmatpush1.bf16.msra.mxu0 0
      %465 = vmatprep.subr.bf16.mxu0 0
      %466 = vmatpush1.bf16.msra.mxu0 0
      %467 = vmatprep.subr.bf16.mxu0 0
      %468 = vmatpush1.bf16.msra.mxu0 0
      %469 = vmatprep.subr.bf16.mxu0 0
      %470 = vmatpush1.bf16.msra.mxu0 0
      %471 = vmatprep.subr.bf16.mxu0 0
      %472 = vmatpush1.bf16.msra.mxu0 0
      %473 = vmatprep.subr.bf16.mxu0 0
      %474 = vmatpush1.bf16.msra.mxu0 0
      %475 = vmatprep.subr.bf16.mxu0 0
      %476 = vmatpush1.bf16.msra.mxu0 0
      %477 = vmatprep.subr.bf16.mxu0 0
      %478 = vmatpush1.bf16.msra.mxu0 0
      %479 = vmatprep.subr.bf16.mxu0 0
      %480 = vmatpush1.bf16.msra.mxu0 0
      %481 = vmatprep.subr.bf16.mxu0 0
      %482 = vmatpush1.bf16.msra.mxu0 0
      %483 = vmatprep.subr.bf16.mxu0 0
      %484 = vmatpush1.bf16.msra.mxu0 0
      %485 = vmatprep.subr.bf16.mxu0 0
      %486 = vmatpush1.bf16.msra.mxu0 0
      %487 = vmatprep.subr.bf16.mxu0 0
      %488 = vmatpush1.bf16.msra.mxu0 0
      %489 = vmatprep.subr.bf16.mxu0 0
      %490 = vmatpush1.bf16.msra.mxu0 0
      %491 = vmatprep.subr.bf16.mxu0 0
      %492 = vmatpush1.bf16.msra.mxu0 0
      %493 = vmatprep.mubr.bf16.mxu0 0
      %494 = vmatmul.mubr.bf16.gmra.mrb[0].mxu0 %v452
      %v495 = vpop.f32.mrb[0].mxu0
      %v496 = vadd.f32 %v448, %v495
      %v497 = vpop.f32.mrb[0].mxu0
      %v498 = vadd.f32 %v448, %v497
      %v499 = vpop.f32.mrb[0].mxu0
      %v500 = vpop.f32.mrb[0].mxu0
      %501 = vdwg.mxu0
      %v502 = vlaneseq
      %v503 = vand.u32 %v502, 127
      %v504 = vadd.s32 %v503, 128
      %vm505 = vcmp.ge.s32.totalorder %v503, 16
      %vm506 = vcmp.ge.s32.totalorder %v504, 16
      %p507 = scmp.gt.s32.totalorder %s24, 0
      %s508 = scalar_select %p507, 1, 0
      %v509 = vstv %s508
      %vm510 = vcmp.eq.s32.totalorder %v509, 1
      %vm511 = vmor %vm505, %vm510
      %vm512 = vmor %vm506, %vm510
      %vm513 = vcmp.lt.s32.totalorder %v503, 144
      %vm514 = vcmp.lt.s32.totalorder %v504, 144
      %p515 = scmp.lt.s32.totalorder %s24, 1
      %s516 = scalar_select %p515, 1, 0
      %v517 = vstv %s516
      %vm518 = vcmp.eq.s32.totalorder %v517, 1
      %vm519 = vmor %vm513, %vm518
      %vm520 = vmor %vm514, %vm518
      %vm521 = vmand %vm511, %vm519
      %vm522 = vmand %vm512, %vm520
      %v523 = vsel %vm521, 1, 0
      %v524 = vsel %vm522, 1, 0
      %vm525 = vcmp.eq.s32.totalorder %v523, 1
      %vm526 = vcmp.eq.s32.totalorder %v524, 1
      %v527 = vsel %vm525, %v496, 0.0
      %v528 = vsel %vm526, %v498, 0.0
      %531 = vrot.lane.b32.xlu0 %v527, 1
      %v532 = vpop.permute.xlu0 %531
      %533 = vrot.lane.b32.xlu0 %v528, 1
      %v534 = vpop.permute.xlu0 %533
      %vm535 = vcmask 7168
      %v536 = vsel %vm535, %v532, %v534
      %v539 = vsel %vm535, 0.0, %v532
      %540 = vrot.lane.b32.xlu0 %v527, 127
      %v541 = vpop.permute.xlu0 %540
      %542 = vrot.lane.b32.xlu0 %v528, 127
      %v543 = vpop.permute.xlu0 %542
      %vm544 = vcmask 1039360
      %v545 = vsel %vm544, %v541, %v543
      %vm548 = vcmask 252928
      %v549 = vsel %vm548, %v543, 0.0
      %551 = vset.pattern.permute.xlu0 0
      %552 = vperm.xlu0 %551, %v375
      %v553 = vpop.permute.xlu0 %552
      %v555 = vmul.f32 %v539, %v553
      %v556 = vadd.f32 %v555, 0.0
      %557 = vset.pattern.permute.xlu0 1
      %558 = vperm.xlu0 %557, %v375
      %v559 = vpop.permute.xlu0 %558
      %v561 = vmul.f32 %v527, %v559
      %v562 = vadd.f32 %v561, 0.0
      %563 = vset.pattern.permute.xlu0 2
      %564 = vperm.xlu0 %563, %v375
      %v565 = vpop.permute.xlu0 %564
      %v567 = vmul.f32 %v545, %v565
      %v568 = vadd.f32 %v567, 0.0
      %569 = vset.pattern.permute.xlu0 3
      %570 = vperm.xlu0 %569, %v375
      %v571 = vpop.permute.xlu0 %570
      %v573 = vmul.f32 %v539, %v571
      %v574 = vmul.f32 %v536, %v571
      %577 = vrot.lane.b32.xlu0 %v573, 112
      %v578 = vpop.permute.xlu0 %577
      %579 = vrot.lane.b32.xlu0 %v574, 112
      %v580 = vpop.permute.xlu0 %579
      %vm581 = vcmask 916480
      %v582 = vsel %vm581, %v578, %v580
      %v584 = vadd.f32 %v556, %v582
      %585 = vset.pattern.permute.xlu0 4
      %586 = vperm.xlu0 %585, %v375
      %v587 = vpop.permute.xlu0 %586
      %v589 = vmul.f32 %v527, %v587
      %v590 = vmul.f32 %v528, %v587
      %593 = vrot.lane.b32.xlu0 %v589, 112
      %v594 = vpop.permute.xlu0 %593
      %595 = vrot.lane.b32.xlu0 %v590, 112
      %v596 = vpop.permute.xlu0 %595
      %v597 = vsel %vm581, %v594, %v596
      %v599 = vadd.f32 %v562, %v597
      %600 = vset.pattern.permute.xlu0 5
      %601 = vperm.xlu0 %600, %v375
      %v602 = vpop.permute.xlu0 %601
      %v604 = vmul.f32 %v545, %v602
      %v605 = vmul.f32 %v549, %v602
      %608 = vrot.lane.b32.xlu0 %v604, 112
      %v609 = vpop.permute.xlu0 %608
      %610 = vrot.lane.b32.xlu0 %v605, 112
      %v611 = vpop.permute.xlu0 %610
      %v612 = vsel %vm581, %v609, %v611
      %v614 = vadd.f32 %v568, %v612
      %615 = vset.pattern.permute.xlu0 6
      %616 = vperm.xlu0 %615, %v375
      %v617 = vpop.permute.xlu0 %616
      %v619 = vmul.f32 %v539, %v617
      %v620 = vmul.f32 %v536, %v617
      %623 = vrot.lane.b32.xlu0 %v619, 96
      %v624 = vpop.permute.xlu0 %623
      %625 = vrot.lane.b32.xlu0 %v620, 96
      %v626 = vpop.permute.xlu0 %625
      %vm627 = vcmask 785408
      %v628 = vsel %vm627, %v624, %v626
      %v630 = vadd.f32 %v584, %v628
      %631 = vset.pattern.permute.xlu0 7
      %632 = vperm.xlu0 %631, %v375
      %v633 = vpop.permute.xlu0 %632
      %v635 = vmul.f32 %v527, %v633
      %v636 = vmul.f32 %v528, %v633
      %639 = vrot.lane.b32.xlu0 %v635, 96
      %v640 = vpop.permute.xlu0 %639
      %641 = vrot.lane.b32.xlu0 %v636, 96
      %v642 = vpop.permute.xlu0 %641
      %v643 = vsel %vm627, %v640, %v642
      %v645 = vadd.f32 %v599, %v643
      %646 = vset.pattern.permute.xlu0 8
      %647 = vperm.xlu0 %646, %v375
      %v648 = vpop.permute.xlu0 %647
      %v650 = vmul.f32 %v545, %v648
      %v651 = vmul.f32 %v549, %v648
      %654 = vrot.lane.b32.xlu0 %v650, 96
      %v655 = vpop.permute.xlu0 %654
      %656 = vrot.lane.b32.xlu0 %v651, 96
      %v657 = vpop.permute.xlu0 %656
      %v658 = vsel %vm627, %v655, %v657
      %v660 = vadd.f32 %v614, %v658
      %vm661 = vcmp.lt.s32.totalorder %v503, 0
      %v662 = vsub.s32 0, %v503
      %v663 = vsel %vm661, %v662, %v503
      %v664 = vshrl.u32 %v663, 4
      %v665 = vand.u32 %v663, 15
      %v666 = vsub.s32 0, %v665
      %v667 = vsel %vm661, %v666, %v665
      %vm668 = vcmp.ne.s32.totalorder %v667, 0
      %vm669 = vcmp.lt.s32.totalorder %v667, 0
      %vm670 = vmand %vm669, %vm668
      %v671 = vadd.s32 %v667, 16
      %v672 = vsel %vm670, %v671, %v667
      %vm673 = vcmp.ne.s32.totalorder %v672, 0
      %v674 = vsel %vm673, 1, 0
      %vm675 = vcmp.eq.s32.totalorder %v674, 1
      %v676 = vsel %vm675, %v630, 0.0
      %v677 = vadd.f32 %v676, %v645
      %vm678 = vcmp.ne.s32.totalorder %v672, 15
      %v679 = vsel %vm678, 1, 0
      %vm680 = vcmp.eq.s32.totalorder %v679, 1
      %v681 = vsel %vm680, %v660, 0.0
      %v682 = vadd.f32 %v677, %v681
      %684 = vset.pattern.permute.xlu0 0
      %685 = vperm.xlu0 %684, %v376
      %v686 = vpop.permute.xlu0 %685
      %v688 = vadd.f32 %v682, %v686
      %v690 = vrot.slane %v688, 4
      %v692 = vmul.f32 %v688, %v690
      %v693 = vsel %vm384, %v692, 0.0
      %694 = vadd.xlane.f32.xlu0 %v693
      %v695 = vpop.xlane.xlu0 %694
      %vm696 = vcmask 3072
      %697 = vst.msk [vmem:[%s367] sm:$0xf] %vm696, %v695
      %p698 = scmp.lt.s32.totalorder %s23, 1
      %s699 = scalar_select %p698, %s23, 1
      %p700 = scmp.lt.s32.totalorder %s24, 1
      %s701 = scalar_select %p700, %s24, 1
      %s702 = smul.addr %s699, 2
      %s703 = sadd.s32 %s701, %s702
      %s704 = smul.addr %s703, 4
      %s705 = scalar_lea.vmem %s8, %s704
      // Predicated region
      $region53: #{nafnet_block.2} parent=51 // pred_check
        %p706 = pneg %p233
      $region54: #{nafnet_block.2} parent=51 // pred_check_branch
        %708 = sbr.rel (%p706) target = $region56
      $region55: #{nafnet_block.2} parent=51 // pred_region
        _
      $region56: #{nafnet_block.2} parent=51 // pred_fallthru
        _
    $region52: #{nafnet_block.2} parent=5 // pred_fallthru
      _
    %p709 = scmp.le.s32.totalorder 2, %s14
    // Predicated region
    $region57: #{nafnet_block.2} parent=5 // pred_check
      %p710 = pneg %p709
    $region58: #{nafnet_block.2} parent=5 // pred_check_branch
      %712 = sbr.rel (%p710) target = $region60
    $region59: #{nafnet_block.2} parent=5 // pred_region
      %s713 = ssub.s32 %s14, 2
      // Predicated region
      $region61: #{nafnet_block.2} parent=59 // pred_check
        %p714 = pneg %p239
      $region62: #{nafnet_block.2} parent=59 // pred_check_branch
        %716 = sbr.rel (%p714) target = $region64
      $region63: #{nafnet_block.2} parent=59 // pred_region
        %p717 = scmp.lt.s32.totalorder %s25, 1
        %s718 = scalar_select %p717, %s25, 1
        %p719 = scmp.lt.s32.totalorder %s26, 1
        %s720 = scalar_select %p719, %s26, 1
        %s721 = smul.addr %s718, 2
        %s722 = sadd.s32 %s720, %s721
        %s723 = smul.addr %s722, 4
        %s724 = scalar_lea.vmem %s8, %s723
      $region64: #{nafnet_block.2} parent=59 // pred_fallthru
        _
    $region60: #{nafnet_block.2} parent=5 // pred_fallthru
      _
  $region6: #{nafnet_block.2} parent=0 // loop_footer
    %s18 = sadd.s32 1, %s14
  $region7: #{nafnet_block.2} parent=0 // loop_footer_branch
    %13 = sbr.rel target = $region3
  $region8: #{nafnet_block.2} parent=0 // loop_exit
    _

// kernel: nafnet_block.3
$region0: #{nafnet_block.3}
  #allocation0 [shape = 'u32[]', space=smem, size = 0x4, offset = 0x4, fixed_abs, tag = 'smem constant byte address 0x4 - core index']
  #allocation1 [shape = 'u32[144,128]{1,0:T(1,128)}', space=vmem, size = 0x12000, scoped, tag = 'internal scratch']
  %s0 = inlined_call_operand.vmem [shape: f32[2,4,256], index: 0, kind: input, shape index: {}]
  %s1 = inlined_call_operand.vmem [shape: f32[2,2,4,32], index: 1, kind: input, shape index: {}]
  %s2 = inlined_call_operand.vmem [shape: f32[2,4,1], index: 2, kind: input, shape index: {}]
  %s3 = inlined_call_operand.vmem [shape: f32[4,1], index: 3, kind: input, shape index: {}]
  %s4 = inlined_call_operand.vmem [shape: f32[4,1], index: 4, kind: input, shape index: {}]
  %s5 = inlined_call_operand.vmem [shape: bf16[8,4], index: 5, kind: input, shape index: {}]
  %s6 = inlined_call_operand.vmem [shape: f32[8,1], index: 6, kind: input, shape index: {}]
  %s7 = inlined_call_operand.vmem [shape: f32[8,9], index: 7, kind: input, shape index: {}]
  %s8 = inlined_call_operand.vmem [shape: f32[8,1], index: 8, kind: input, shape index: {}]
  %s9 = inlined_call_operand.vmem [shape: bf16[4,4], index: 9, kind: input, shape index: {}]
  %s10 = inlined_call_operand.vmem [shape: f32[4,1], index: 10, kind: input, shape index: {}]
  %s11 = inlined_call_operand.vmem [shape: f32[4,1], index: 11, kind: input, shape index: {}]
  %s12 = inlined_call_operand.vmem [shape: f32[4,1], index: 12, kind: input, shape index: {}]
  %s13 = inlined_call_operand.vmem [shape: f32[4,1], index: 13, kind: input, shape index: {}]
  %s14 = inlined_call_operand.vmem [shape: bf16[8,4], index: 14, kind: input, shape index: {}]
  %s15 = inlined_call_operand.vmem [shape: f32[8,1], index: 15, kind: input, shape index: {}]
  %s16 = inlined_call_operand.vmem [shape: bf16[4,4], index: 16, kind: input, shape index: {}]
  %s17 = inlined_call_operand.vmem [shape: f32[4,1], index: 17, kind: input, shape index: {}]
  %s18 = inlined_call_operand.vmem [shape: f32[4,1], index: 18, kind: input, shape index: {}]
  %s19 = inlined_call_operand.vmem [shape: f32[2,4,256], index: 19, kind: output, shape index: {}]
  %s20 = sld [smem:[#allocation0]]
  $region109: #{nafnet_block.3} parent=0
    _
  %s22 = ssub.s32 1, %s20
  %s23 = scalar_select 0, %s22, %s20
  loop: start=0, step=1, limit=6
  $region2: #{nafnet_block.3} parent=0 // loop_pre_header
    _
  $region3: #{nafnet_block.3} parent=0 // loop_header
    %s25 = sphi 0, %s29
    %p26 = scmp.ge.s32.totalorder %s25, 6
    %s32 = sphi 0, %s44
    %s33 = sphi 0, %s40
    %s34 = sphi 0, %s32
    %s35 = sphi 0, %s33
    %s36 = sphi 0, %s34
    %s37 = sphi 0, %s35
    %s49 = sphi 0, %s51
    %s52 = sphi 0, %s49
    %s53 = sphi 0, %s52
    %s69 = sphi 0, %s53
    %s77 = sphi 0, %s79
    %s80 = sphi 0, %s77
    %s81 = sphi 0, %s80
    %s97 = sphi 0, %s81
    %s103 = sphi 0, %s105
    %s106 = sphi 0, %s103
    %s107 = sphi 0, %s106
    %s123 = sphi 0, %s107
    %s127 = sphi 0, %s127
    %s129 = sphi 0, %s127
    %s130 = sphi 0, %s129
    %s144 = sphi 0, %s130
    %s148 = sphi 0, %s148
    %s150 = sphi 0, %s148
    %s151 = sphi 0, %s150
    %s165 = sphi 0, %s151
    %s169 = sphi 0, %s169
    %s171 = sphi 0, %s169
    %s172 = sphi 0, %s171
    %s186 = sphi 0, %s172
    %s190 = sphi 0, %s190
    %s192 = sphi 0, %s190
    %s193 = sphi 0, %s192
    %s207 = sphi 0, %s193
    %s211 = sphi 0, %s211
    %s213 = sphi 0, %s211
    %s214 = sphi 0, %s213
    %s228 = sphi 0, %s214
    %s232 = sphi 0, %s232
    %s234 = sphi 0, %s232
    %s235 = sphi 0, %s234
    %s249 = sphi 0, %s235
    %s253 = sphi 0, %s253
    %s255 = sphi 0, %s253
    %s256 = sphi 0, %s255
    %s270 = sphi 0, %s256
    %s274 = sphi 0, %s274
    %s276 = sphi 0, %s274
    %s277 = sphi 0, %s276
    %s291 = sphi 0, %s277
    %s295 = sphi 0, %s295
    %s297 = sphi 0, %s295
    %s298 = sphi 0, %s297
    %s312 = sphi 0, %s298
    %s316 = sphi 0, %s316
    %s318 = sphi 0, %s316
    %s319 = sphi 0, %s318
    %s333 = sphi 0, %s319
    %s337 = sphi 0, %s337
    %s339 = sphi 0, %s337
    %s340 = sphi 0, %s339
    %s354 = sphi 0, %s340
    %s358 = sphi 0, %s358
    %s360 = sphi 0, %s358
    %s361 = sphi 0, %s360
    %s375 = sphi 0, %s361
    %s379 = sphi 0, %s379
    %s381 = sphi 0, %s379
    %s382 = sphi 0, %s381
    %s396 = sphi 0, %s382
    %s400 = sphi 0, %s400
    %s402 = sphi 0, %s400
    %s403 = sphi 0, %s402
    %s417 = sphi 0, %s403
    %s421 = sphi 0, %s421
    %s423 = sphi 0, %s421
    %s424 = sphi 0, %s423
    %s438 = sphi 0, %s424
    %s442 = sphi 0, %s442
    %s444 = sphi 0, %s442
    %s445 = sphi 0, %s444
    %s459 = sphi 0, %s445
    %s467 = sphi 0, %s469
    %s470 = sphi 0, %s467
    %s471 = sphi 0, %s470
    %s487 = sphi 0, %s471
  $region4: #{nafnet_block.3} parent=0 // loop_header_branch
    %28 = sbr.rel (%p26) target = $region8
  $region5: #{nafnet_block.3} parent=0 // loop_body
    %s30 = ssub.s32 %s25, 1
    %s31 = ssub.s32 %s25, 2
    %s38 = sadd.s32 1, %s33
    %p39 = scmp.ge.s32.totalorder %s38, 2
    %s40 = scalar_select %p39, 0, %s38
    %s41 = sadd.s32 1, %s32
    %s42 = scalar_select %p39, %s41, %s32
    %p43 = scmp.ge.s32.totalorder %s42, 2
    %s44 = scalar_select %p43, 0, %s42
    %s45 = ssub.s32 %s32, %s44
    %s46 = ssub.s32 %s33, %s40
    %s47 = sor.u32 %s45, %s46
    %p48 = scmp.eq.s32.totalorder %s47, 0
    %s50 = sadd.s32 %s49, 1
    %s51 = scalar_select %p48, %s49, %s50
    %p54 = pneg %p48
    %p55 = scmp.eq.s32.totalorder %s25, 3
    %p56 = por %p54, %p55
    %p57 = scmp.ne.s32.totalorder %s49, %s52
    %p58 = scmp.eq.s32.totalorder %s25, 0
    %p59 = por %p57, %p58
    %p60 = scmp.ne.s32.totalorder %s49, %s52
    %p61 = scmp.eq.s32.totalorder %s30, 3
    %p62 = por %p60, %p61
    %p63 = scmp.ne.s32.totalorder %s52, %s53
    %p64 = scmp.eq.s32.totalorder %s30, 0
    %p65 = por %p63, %p64
    %p66 = scmp.ne.s32.totalorder %s52, %s53
    %p67 = scmp.eq.s32.totalorder %s31, 3
    %p68 = por %p66, %p67
    %p70 = scmp.ne.s32.totalorder %s53, %s69
    %p71 = scmp.eq.s32.totalorder %s31, 0
    %p72 = por %p70, %p71
    %s73 = ssub.s32 %s32, %s44
    %s74 = ssub.s32 %s33, %s40
    %s75 = sor.u32 %s73, %s74
    %p76 = scmp.eq.s32.totalorder %s75, 0
    %s78 = sadd.s32 %s77, 1
    %s79 = scalar_select %p76, %s77, %s78
    %p82 = pneg %p76
    %p83 = scmp.eq.s32.totalorder %s25, 3
    %p84 = por %p82, %p83
    %p85 = scmp.ne.s32.totalorder %s77, %s80
    %p86 = scmp.eq.s32.totalorder %s25, 0
    %p87 = por %p85, %p86
    %p88 = scmp.ne.s32.totalorder %s77, %s80
    %p89 = scmp.eq.s32.totalorder %s30, 3
    %p90 = por %p88, %p89
    %p91 = scmp.ne.s32.totalorder %s80, %s81
    %p92 = scmp.eq.s32.totalorder %s30, 0
    %p93 = por %p91, %p92
    %p94 = scmp.ne.s32.totalorder %s80, %s81
    %p95 = scmp.eq.s32.totalorder %s31, 3
    %p96 = por %p94, %p95
    %p98 = scmp.ne.s32.totalorder %s81, %s97
    %p99 = scmp.eq.s32.totalorder %s31, 0
    %p100 = por %p98, %p99
    %s101 = ssub.s32 %s32, %s44
    %p102 = scmp.eq.s32.totalorder %s101, 0
    %s104 = sadd.s32 %s103, 1
    %s105 = scalar_select %p102, %s103, %s104
    %p108 = pneg %p102
    %p109 = scmp.eq.s32.totalorder %s25, 3
    %p110 = por %p108, %p109
    %p111 = scmp.ne.s32.totalorder %s103, %s106
    %p112 = scmp.eq.s32.totalorder %s25, 0
    %p113 = por %p111, %p112
    %p114 = scmp.ne.s32.totalorder %s103, %s106
    %p115 = scmp.eq.s32.totalorder %s30, 3
    %p116 = por %p114, %p115
    %p117 = scmp.ne.s32.totalorder %s106, %s107
    %p118 = scmp.eq.s32.totalorder %s30, 0
    %p119 = por %p117, %p118
    %p120 = scmp.ne.s32.totalorder %s106, %s107
    %p121 = scmp.eq.s32.totalorder %s31, 3
    %p122 = por %p120, %p121
    %p124 = scmp.ne.s32.totalorder %s107, %s123
    %p125 = scmp.eq.s32.totalorder %s31, 0
    %p126 = por %p124, %p125
    %s128 = sadd.s32 %s127, 1
    %p131 = scmp.eq.s32.totalorder %s25, 3
    %p132 = scmp.ne.s32.totalorder %s127, %s129
    %p133 = scmp.eq.s32.totalorder %s25, 0
    %p134 = por %p132, %p133
    %p135 = scmp.ne.s32.totalorder %s127, %s129
    %p136 = scmp.eq.s32.totalorder %s30, 3
    %p137 = por %p135, %p136
    %p138 = scmp.ne.s32.totalorder %s129, %s130
    %p139 = scmp.eq.s32.totalorder %s30, 0
    %p140 = por %p138, %p139
    %p141 = scmp.ne.s32.totalorder %s129, %s130
    %p142 = scmp.eq.s32.totalorder %s31, 3
    %p143 = por %p141, %p142
    %p145 = scmp.ne.s32.totalorder %s130, %s144
    %p146 = scmp.eq.s32.totalorder %s31, 0
    %p147 = por %p145, %p146
    %s149 = sadd.s32 %s148, 1
    %p152 = scmp.eq.s32.totalorder %s25, 3
    %p153 = scmp.ne.s32.totalorder %s148, %s150
    %p154 = scmp.eq.s32.totalorder %s25, 0
    %p155 = por %p153, %p154
    %p156 = scmp.ne.s32.totalorder %s148, %s150
    %p157 = scmp.eq.s32.totalorder %s30, 3
    %p158 = por %p156, %p157
    %p159 = scmp.ne.s32.totalorder %s150, %s151
    %p160 = scmp.eq.s32.totalorder %s30, 0
    %p161 = por %p159, %p160
    %p162 = scmp.ne.s32.totalorder %s150, %s151
    %p163 = scmp.eq.s32.totalorder %s31, 3
    %p164 = por %p162, %p163
    %p166 = scmp.ne.s32.totalorder %s151, %s165
    %p167 = scmp.eq.s32.totalorder %s31, 0
    %p168 = por %p166, %p167
    %s170 = sadd.s32 %s169, 1
    %p173 = scmp.eq.s32.totalorder %s25, 3
    %p174 = scmp.ne.s32.totalorder %s169, %s171
    %p175 = scmp.eq.s32.totalorder %s25, 0
    %p176 = por %p174, %p175
    %p177 = scmp.ne.s32.totalorder %s169, %s171
    %p178 = scmp.eq.s32.totalorder %s30, 3
    %p179 = por %p177, %p178
    %p180 = scmp.ne.s32.totalorder %s171, %s172
    %p181 = scmp.eq.s32.totalorder %s30, 0
    %p182 = por %p180, %p181
    %p183 = scmp.ne.s32.totalorder %s171, %s172
    %p184 = scmp.eq.s32.totalorder %s31, 3
    %p185 = por %p183, %p184
    %p187 = scmp.ne.s32.totalorder %s172, %s186
    %p188 = scmp.eq.s32.totalorder %s31, 0
    %p189 = por %p187, %p188
    %s191 = sadd.s32 %s190, 1
    %p194 = scmp.eq.s32.totalorder %s25, 3
    %p195 = scmp.ne.s32.totalorder %s190, %s192
    %p196 = scmp.eq.s32.totalorder %s25, 0
    %p197 = por %p195, %p196
    %p198 = scmp.ne.s32.totalorder %s190, %s192
    %p199 = scmp.eq.s32.totalorder %s30, 3
    %p200 = por %p198, %p199
    %p201 = scmp.ne.s32.totalorder %s192, %s193
    %p202 = scmp.eq.s32.totalorder %s30, 0
    %p203 = por %p201, %p202
    %p204 = scmp.ne.s32.totalorder %s192, %s193
    %p205 = scmp.eq.s32.totalorder %s31, 3
    %p206 = por %p204, %p205
    %p208 = scmp.ne.s32.totalorder %s193, %s207
    %p209 = scmp.eq.s32.totalorder %s31, 0
    %p210 = por %p208, %p209
    %s212 = sadd.s32 %s211, 1
    %p215 = scmp.eq.s32.totalorder %s25, 3
    %p216 = scmp.ne.s32.totalorder %s211, %s213
    %p217 = scmp.eq.s32.totalorder %s25, 0
    %p218 = por %p216, %p217
    %p219 = scmp.ne.s32.totalorder %s211, %s213
    %p220 = scmp.eq.s32.totalorder %s30, 3
    %p221 = por %p219, %p220
    %p222 = scmp.ne.s32.totalorder %s213, %s214
    %p223 = scmp.eq.s32.totalorder %s30, 0
    %p224 = por %p222, %p223
    %p225 = scmp.ne.s32.totalorder %s213, %s214
    %p226 = scmp.eq.s32.totalorder %s31, 3
    %p227 = por %p225, %p226
    %p229 = scmp.ne.s32.totalorder %s214, %s228
    %p230 = scmp.eq.s32.totalorder %s31, 0
    %p231 = por %p229, %p230
    %s233 = sadd.s32 %s232, 1
    %p236 = scmp.eq.s32.totalorder %s25, 3
    %p237 = scmp.ne.s32.totalorder %s232, %s234
    %p238 = scmp.eq.s32.totalorder %s25, 0
    %p239 = por %p237, %p238
    %p240 = scmp.ne.s32.totalorder %s232, %s234
    %p241 = scmp.eq.s32.totalorder %s30, 3
    %p242 = por %p240, %p241
    %p243 = scmp.ne.s32.totalorder %s234, %s235
    %p244 = scmp.eq.s32.totalorder %s30, 0
    %p245 = por %p243, %p244
    %p246 = scmp.ne.s32.totalorder %s234, %s235
    %p247 = scmp.eq.s32.totalorder %s31, 3
    %p248 = por %p246, %p247
    %p250 = scmp.ne.s32.totalorder %s235, %s249
    %p251 = scmp.eq.s32.totalorder %s31, 0
    %p252 = por %p250, %p251
    %s254 = sadd.s32 %s253, 1
    %p257 = scmp.eq.s32.totalorder %s25, 3
    %p258 = scmp.ne.s32.totalorder %s253, %s255
    %p259 = scmp.eq.s32.totalorder %s25, 0
    %p260 = por %p258, %p259
    %p261 = scmp.ne.s32.totalorder %s253, %s255
    %p262 = scmp.eq.s32.totalorder %s30, 3
    %p263 = por %p261, %p262
    %p264 = scmp.ne.s32.totalorder %s255, %s256
    %p265 = scmp.eq.s32.totalorder %s30, 0
    %p266 = por %p264, %p265
    %p267 = scmp.ne.s32.totalorder %s255, %s256
    %p268 = scmp.eq.s32.totalorder %s31, 3
    %p269 = por %p267, %p268
    %p271 = scmp.ne.s32.totalorder %s256, %s270
    %p272 = scmp.eq.s32.totalorder %s31, 0
    %p273 = por %p271, %p272
    %s275 = sadd.s32 %s274, 1
    %p278 = scmp.eq.s32.totalorder %s25, 3
    %p279 = scmp.ne.s32.totalorder %s274, %s276
    %p280 = scmp.eq.s32.totalorder %s25, 0
    %p281 = por %p279, %p280
    %p282 = scmp.ne.s32.totalorder %s274, %s276
    %p283 = scmp.eq.s32.totalorder %s30, 3
    %p284 = por %p282, %p283
    %p285 = scmp.ne.s32.totalorder %s276, %s277
    %p286 = scmp.eq.s32.totalorder %s30, 0
    %p287 = por %p285, %p286
    %p288 = scmp.ne.s32.totalorder %s276, %s277
    %p289 = scmp.eq.s32.totalorder %s31, 3
    %p290 = por %p288, %p289
    %p292 = scmp.ne.s32.totalorder %s277, %s291
    %p293 = scmp.eq.s32.totalorder %s31, 0
    %p294 = por %p292, %p293
    %s296 = sadd.s32 %s295, 1
    %p299 = scmp.eq.s32.totalorder %s25, 3
    %p300 = scmp.ne.s32.totalorder %s295, %s297
    %p301 = scmp.eq.s32.totalorder %s25, 0
    %p302 = por %p300, %p301
    %p303 = scmp.ne.s32.totalorder %s295, %s297
    %p304 = scmp.eq.s32.totalorder %s30, 3
    %p305 = por %p303, %p304
    %p306 = scmp.ne.s32.totalorder %s297, %s298
    %p307 = scmp.eq.s32.totalorder %s30, 0
    %p308 = por %p306, %p307
    %p309 = scmp.ne.s32.totalorder %s297, %s298
    %p310 = scmp.eq.s32.totalorder %s31, 3
    %p311 = por %p309, %p310
    %p313 = scmp.ne.s32.totalorder %s298, %s312
    %p314 = scmp.eq.s32.totalorder %s31, 0
    %p315 = por %p313, %p314
    %s317 = sadd.s32 %s316, 1
    %p320 = scmp.eq.s32.totalorder %s25, 3
    %p321 = scmp.ne.s32.totalorder %s316, %s318
    %p322 = scmp.eq.s32.totalorder %s25, 0
    %p323 = por %p321, %p322
    %p324 = scmp.ne.s32.totalorder %s316, %s318
    %p325 = scmp.eq.s32.totalorder %s30, 3
    %p326 = por %p324, %p325
    %p327 = scmp.ne.s32.totalorder %s318, %s319
    %p328 = scmp.eq.s32.totalorder %s30, 0
    %p329 = por %p327, %p328
    %p330 = scmp.ne.s32.totalorder %s318, %s319
    %p331 = scmp.eq.s32.totalorder %s31, 3
    %p332 = por %p330, %p331
    %p334 = scmp.ne.s32.totalorder %s319, %s333
    %p335 = scmp.eq.s32.totalorder %s31, 0
    %p336 = por %p334, %p335
    %s338 = sadd.s32 %s337, 1
    %p341 = scmp.eq.s32.totalorder %s25, 3
    %p342 = scmp.ne.s32.totalorder %s337, %s339
    %p343 = scmp.eq.s32.totalorder %s25, 0
    %p344 = por %p342, %p343
    %p345 = scmp.ne.s32.totalorder %s337, %s339
    %p346 = scmp.eq.s32.totalorder %s30, 3
    %p347 = por %p345, %p346
    %p348 = scmp.ne.s32.totalorder %s339, %s340
    %p349 = scmp.eq.s32.totalorder %s30, 0
    %p350 = por %p348, %p349
    %p351 = scmp.ne.s32.totalorder %s339, %s340
    %p352 = scmp.eq.s32.totalorder %s31, 3
    %p353 = por %p351, %p352
    %p355 = scmp.ne.s32.totalorder %s340, %s354
    %p356 = scmp.eq.s32.totalorder %s31, 0
    %p357 = por %p355, %p356
    %s359 = sadd.s32 %s358, 1
    %p362 = scmp.eq.s32.totalorder %s25, 3
    %p363 = scmp.ne.s32.totalorder %s358, %s360
    %p364 = scmp.eq.s32.totalorder %s25, 0
    %p365 = por %p363, %p364
    %p366 = scmp.ne.s32.totalorder %s358, %s360
    %p367 = scmp.eq.s32.totalorder %s30, 3
    %p368 = por %p366, %p367
    %p369 = scmp.ne.s32.totalorder %s360, %s361
    %p370 = scmp.eq.s32.totalorder %s30, 0
    %p371 = por %p369, %p370
    %p372 = scmp.ne.s32.totalorder %s360, %s361
    %p373 = scmp.eq.s32.totalorder %s31, 3
    %p374 = por %p372, %p373
    %p376 = scmp.ne.s32.totalorder %s361, %s375
    %p377 = scmp.eq.s32.totalorder %s31, 0
    %p378 = por %p376, %p377
    %s380 = sadd.s32 %s379, 1
    %p383 = scmp.eq.s32.totalorder %s25, 3
    %p384 = scmp.ne.s32.totalorder %s379, %s381
    %p385 = scmp.eq.s32.totalorder %s25, 0
    %p386 = por %p384, %p385
    %p387 = scmp.ne.s32.totalorder %s379, %s381
    %p388 = scmp.eq.s32.totalorder %s30, 3
    %p389 = por %p387, %p388
    %p390 = scmp.ne.s32.totalorder %s381, %s382
    %p391 = scmp.eq.s32.totalorder %s30, 0
    %p392 = por %p390, %p391
    %p393 = scmp.ne.s32.totalorder %s381, %s382
    %p394 = scmp.eq.s32.totalorder %s31, 3
    %p395 = por %p393, %p394
    %p397 = scmp.ne.s32.totalorder %s382, %s396
    %p398 = scmp.eq.s32.totalorder %s31, 0
    %p399 = por %p397, %p398
    %s401 = sadd.s32 %s400, 1
    %p404 = scmp.eq.s32.totalorder %s25, 3
    %p405 = scmp.ne.s32.totalorder %s400, %s402
    %p406 = scmp.eq.s32.totalorder %s25, 0
    %p407 = por %p405, %p406
    %p408 = scmp.ne.s32.totalorder %s400, %s402
    %p409 = scmp.eq.s32.totalorder %s30, 3
    %p410 = por %p408, %p409
    %p411 = scmp.ne.s32.totalorder %s402, %s403
    %p412 = scmp.eq.s32.totalorder %s30, 0
    %p413 = por %p411, %p412
    %p414 = scmp.ne.s32.totalorder %s402, %s403
    %p415 = scmp.eq.s32.totalorder %s31, 3
    %p416 = por %p414, %p415
    %p418 = scmp.ne.s32.totalorder %s403, %s417
    %p419 = scmp.eq.s32.totalorder %s31, 0
    %p420 = por %p418, %p419
    %s422 = sadd.s32 %s421, 1
    %p425 = scmp.eq.s32.totalorder %s25, 3
    %p426 = scmp.ne.s32.totalorder %s421, %s423
    %p427 = scmp.eq.s32.totalorder %s25, 0
    %p428 = por %p426, %p427
    %p429 = scmp.ne.s32.totalorder %s421, %s423
    %p430 = scmp.eq.s32.totalorder %s30, 3
    %p431 = por %p429, %p430
    %p432 = scmp.ne.s32.totalorder %s423, %s424
    %p433 = scmp.eq.s32.totalorder %s30, 0
    %p434 = por %p432, %p433
    %p435 = scmp.ne.s32.totalorder %s423, %s424
    %p436 = scmp.eq.s32.totalorder %s31, 3
    %p437 = por %p435, %p436
    %p439 = scmp.ne.s32.totalorder %s424, %s438
    %p440 = scmp.eq.s32.totalorder %s31, 0
    %p441 = por %p439, %p440
    %s443 = sadd.s32 %s442, 1
    %p446 = scmp.eq.s32.totalorder %s25, 3
    %p447 = scmp.ne.s32.totalorder %s442, %s444
    %p448 = scmp.eq.s32.totalorder %s25, 0
    %p449 = por %p447, %p448
    %p450 = scmp.ne.s32.totalorder %s442, %s444
    %p451 = scmp.eq.s32.totalorder %s30, 3
    %p452 = por %p450, %p451
    %p453 = scmp.ne.s32.totalorder %s444, %s445
    %p454 = scmp.eq.s32.totalorder %s30, 0
    %p455 = por %p453, %p454
    %p456 = scmp.ne.s32.totalorder %s444, %s445
    %p457 = scmp.eq.s32.totalorder %s31, 3
    %p458 = por %p456, %p457
    %p460 = scmp.ne.s32.totalorder %s445, %s459
    %p461 = scmp.eq.s32.totalorder %s31, 0
    %p462 = por %p460, %p461
    %s463 = ssub.s32 %s32, %s44
    %s464 = ssub.s32 %s33, %s40
    %s465 = sor.u32 %s463, %s464
    %p466 = scmp.eq.s32.totalorder %s465, 0
    %s468 = sadd.s32 %s467, 1
    %s469 = scalar_select %p466, %s467, %s468
    %p472 = pneg %p466
    %p473 = scmp.eq.s32.totalorder %s25, 3
    %p474 = por %p472, %p473
    %p475 = scmp.ne.s32.totalorder %s467, %s470
    %p476 = scmp.eq.s32.totalorder %s25, 0
    %p477 = por %p475, %p476
    %p478 = scmp.ne.s32.totalorder %s467, %s470
    %p479 = scmp.eq.s32.totalorder %s30, 3
    %p480 = por %p478, %p479
    %p481 = scmp.ne.s32.totalorder %s470, %s471
    %p482 = scmp.eq.s32.totalorder %s30, 0
    %p483 = por %p481, %p482
    %p484 = scmp.ne.s32.totalorder %s470, %s471
    %p485 = scmp.eq.s32.totalorder %s31, 3
    %p486 = por %p484, %p485
    %p488 = scmp.ne.s32.totalorder %s471, %s487
    %p489 = scmp.eq.s32.totalorder %s31, 0
    %p490 = por %p488, %p489
    %p491 = scmp.le.s32.totalorder 1, %s25
    %p492 = scmp.lt.s32.totalorder %s25, 5
    %p493 = pnand %p491, %p492
    %p494 = pneg %p493
    // Predicated region
    $region9: #{nafnet_block.3} parent=5 // pred_check
      _
    $region10: #{nafnet_block.3} parent=5 // pred_check_branch
      %496 = sbr.rel (%p493) target = $region12
    $region11: #{nafnet_block.3} parent=5 // pred_region
      %s497 = ssub.s32 %s25, 1
      // Predicated region
      $region13: #{nafnet_block.3} parent=11 // pred_check
        %p498 = pneg %p140
      $region14: #{nafnet_block.3} parent=11 // pred_check_branch
        %500 = sbr.rel (%p498) target = $region16
      $region15: #{nafnet_block.3} parent=11 // pred_region
        _
      $region16: #{nafnet_block.3} parent=11 // pred_fallthru
        _
      // Predicated region
      $region17: #{nafnet_block.3} parent=11 // pred_check
        %p501 = pneg %p161
      $region18: #{nafnet_block.3} parent=11 // pred_check_branch
        %503 = sbr.rel (%p501) target = $region20
      $region19: #{nafnet_block.3} parent=11 // pred_region
        _
      $region20: #{nafnet_block.3} parent=11 // pred_fallthru
        _
      // Predicated region
      $region21: #{nafnet_block.3} parent=11 // pred_check
        %p504 = pneg %p182
      $region22: #{nafnet_block.3} parent=11 // pred_check_branch
        %506 = sbr.rel (%p504) target = $region24
      $region23: #{nafnet_block.3} parent=11 // pred_region
        _
      $region24: #{nafnet_block.3} parent=11 // pred_fallthru
        _
      // Predicated region
      $region25: #{nafnet_block.3} parent=11 // pred_check
        %p507 = pneg %p203
      $region26: #{nafnet_block.3} parent=11 // pred_check_branch
        %509 = sbr.rel (%p507) target = $region28
      $region27: #{nafnet_block.3} parent=11 // pred_region
        _
      $region28: #{nafnet_block.3} parent=11 // pred_fallthru
        _
      // Predicated region
      $region29: #{nafnet_block.3} parent=11 // pred_check
        %p510 = pneg %p224
      $region30: #{nafnet_block.3} parent=11 // pred_check_branch
        %512 = sbr.rel (%p510) target = $region32
      $region31: #{nafnet_block.3} parent=11 // pred_region
        _
      $region32: #{nafnet_block.3} parent=11 // pred_fallthru
        _
      // Predicated region
      $region33: #{nafnet_block.3} parent=11 // pred_check
        %p513 = pneg %p245
      $region34: #{nafnet_block.3} parent=11 // pred_check_branch
        %515 = sbr.rel (%p513) target = $region36
      $region35: #{nafnet_block.3} parent=11 // pred_region
        _
      $region36: #{nafnet_block.3} parent=11 // pred_fallthru
        _
      // Predicated region
      $region37: #{nafnet_block.3} parent=11 // pred_check
        %p516 = pneg %p266
      $region38: #{nafnet_block.3} parent=11 // pred_check_branch
        %518 = sbr.rel (%p516) target = $region40
      $region39: #{nafnet_block.3} parent=11 // pred_region
        _
      $region40: #{nafnet_block.3} parent=11 // pred_fallthru
        _
      // Predicated region
      $region41: #{nafnet_block.3} parent=11 // pred_check
        %p519 = pneg %p287
      $region42: #{nafnet_block.3} parent=11 // pred_check_branch
        %521 = sbr.rel (%p519) target = $region44
      $region43: #{nafnet_block.3} parent=11 // pred_region
        _
      $region44: #{nafnet_block.3} parent=11 // pred_fallthru
        _
      // Predicated region
      $region45: #{nafnet_block.3} parent=11 // pred_check
        %p522 = pneg %p308
      $region46: #{nafnet_block.3} parent=11 // pred_check_branch
        %524 = sbr.rel (%p522) target = $region48
      $region47: #{nafnet_block.3} parent=11 // pred_region
        _
      $region48: #{nafnet_block.3} parent=11 // pred_fallthru
        _
      // Predicated region
      $region49: #{nafnet_block.3} parent=11 // pred_check
        %p525 = pneg %p329
      $region50: #{nafnet_block.3} parent=11 // pred_check_branch
        %527 = sbr.rel (%p525) target = $region52
      $region51: #{nafnet_block.3} parent=11 // pred_region
        _
      $region52: #{nafnet_block.3} parent=11 // pred_fallthru
        _
      // Predicated region
      $region53: #{nafnet_block.3} parent=11 // pred_check
        %p528 = pneg %p350
      $region54: #{nafnet_block.3} parent=11 // pred_check_branch
        %530 = sbr.rel (%p528) target = $region56
      $region55: #{nafnet_block.3} parent=11 // pred_region
        _
      $region56: #{nafnet_block.3} parent=11 // pred_fallthru
        _
      // Predicated region
      $region57: #{nafnet_block.3} parent=11 // pred_check
        %p531 = pneg %p371
      $region58: #{nafnet_block.3} parent=11 // pred_check_branch
        %533 = sbr.rel (%p531) target = $region60
      $region59: #{nafnet_block.3} parent=11 // pred_region
        _
      $region60: #{nafnet_block.3} parent=11 // pred_fallthru
        _
      // Predicated region
      $region61: #{nafnet_block.3} parent=11 // pred_check
        %p534 = pneg %p392
      $region62: #{nafnet_block.3} parent=11 // pred_check_branch
        %536 = sbr.rel (%p534) target = $region64
      $region63: #{nafnet_block.3} parent=11 // pred_region
        _
      $region64: #{nafnet_block.3} parent=11 // pred_fallthru
        _
      // Predicated region
      $region65: #{nafnet_block.3} parent=11 // pred_check
        %p537 = pneg %p413
      $region66: #{nafnet_block.3} parent=11 // pred_check_branch
        %539 = sbr.rel (%p537) target = $region68
      $region67: #{nafnet_block.3} parent=11 // pred_region
        _
      $region68: #{nafnet_block.3} parent=11 // pred_fallthru
        _
      // Predicated region
      $region69: #{nafnet_block.3} parent=11 // pred_check
        %p540 = pneg %p434
      $region70: #{nafnet_block.3} parent=11 // pred_check_branch
        %542 = sbr.rel (%p540) target = $region72
      $region71: #{nafnet_block.3} parent=11 // pred_region
        _
      $region72: #{nafnet_block.3} parent=11 // pred_fallthru
        _
      // Predicated region
      $region73: #{nafnet_block.3} parent=11 // pred_check
        %p543 = pneg %p455
      $region74: #{nafnet_block.3} parent=11 // pred_check_branch
        %545 = sbr.rel (%p543) target = $region76
      $region75: #{nafnet_block.3} parent=11 // pred_region
        _
      $region76: #{nafnet_block.3} parent=11 // pred_fallthru
        _
    $region12: #{nafnet_block.3} parent=5 // pred_fallthru
      _
    %p546 = scmp.lt.s32.totalorder %s25, 4
    // Predicated region
    $region77: #{nafnet_block.3} parent=5 // pred_check
      %p547 = pneg %p546
    $region78: #{nafnet_block.3} parent=5 // pred_check_branch
      %549 = sbr.rel (%p547) target = $region80
    $region79: #{nafnet_block.3} parent=5 // pred_region
      // Predicated region
      $region81: #{nafnet_block.3} parent=79 // pred_check
        %p550 = pneg %p59
      $region82: #{nafnet_block.3} parent=79 // pred_check_branch
        %552 = sbr.rel (%p550) target = $region84
      $region83: #{nafnet_block.3} parent=79 // pred_region
        %p553 = scmp.lt.s32.totalorder %s32, 1
        %s554 = scalar_select %p553, %s32, 1
        %p555 = scmp.lt.s32.totalorder %s33, 1
        %s556 = scalar_select %p555, %s33, 1
        %s557 = smul.addr %s554, 2
        %s558 = sadd.s32 %s556, %s557
        %s559 = smul.addr %s558, 4
        %s560 = scalar_lea.vmem %s0, %s559
      $region84: #{nafnet_block.3} parent=79 // pred_fallthru
        _
      // Predicated region
      $region85: #{nafnet_block.3} parent=79 // pred_check
        %p561 = pneg %p87
      $region86: #{nafnet_block.3} parent=79 // pred_check_branch
        %563 = sbr.rel (%p561) target = $region88
      $region87: #{nafnet_block.3} parent=79 // pred_region
        %p564 = scmp.lt.s32.totalorder %s32, 1
        %s565 = scalar_select %p564, %s32, 1
        %p566 = scmp.lt.s32.totalorder %s33, 1
        %s567 = scalar_select %p566, %s33, 1
        %s568 = smul.addr %s565, 2
        %s569 = sadd.s32 %s567, %s568
        %s570 = smul.addr %s569, 4
        %s571 = scalar_lea.vmem %s1, %s570
      $region88: #{nafnet_block.3} parent=79 // pred_fallthru
        _
      // Predicated region
      $region89: #{nafnet_block.3} parent=79 // pred_check
        %p572 = pneg %p113
      $region90: #{nafnet_block.3} parent=79 // pred_check_branch
        %574 = sbr.rel (%p572) target = $region92
      $region91: #{nafnet_block.3} parent=79 // pred_region
        %p575 = scmp.lt.s32.totalorder %s32, 1
        %s576 = scalar_select %p575, %s32, 1
        %s577 = smul.addr %s576, 4
        %s578 = scalar_lea.vmem %s2, %s577
      $region92: #{nafnet_block.3} parent=79 // pred_fallthru
        _
    $region80: #{nafnet_block.3} parent=5 // pred_fallthru
      _
    %p579 = scmp.le.s32.totalorder 1, %s25
    %p580 = scmp.lt.s32.totalorder %s25, 5
    %p581 = pnand %p579, %p580
    %p582 = pneg %p581
    // Predicated region
    $region93: #{nafnet_block.3} parent=5 // pred_check
      _
    $region94: #{nafnet_block.3} parent=5 // pred_check_branch
      %584 = sbr.rel (%p581) target = $region96
    $region95: #{nafnet_block.3} parent=5 // pred_region
      %s585 = ssub.s32 %s25, 1
      %p586 = scmp.lt.s32.totalorder %s34, 1
      %s587 = scalar_select %p586, %s34, 1
      %p588 = scmp.lt.s32.totalorder %s35, 1
      %s589 = scalar_select %p588, %s35, 1
      %s590 = smul.addr %s587, 2
      %s591 = sadd.s32 %s589, %s590
      %s592 = smul.addr %s591, 4
      %s593 = scalar_lea.vmem %s0, %s592
      %p594 = pneg %p65
      %p595 = pneg %p62
      %p596 = scmp.lt.s32.totalorder %s34, 1
      %s597 = scalar_select %p596, %s34, 1
      %p598 = scmp.lt.s32.totalorder %s35, 1
      %s599 = scalar_select %p598, %s35, 1
      %s600 = smul.addr %s597, 2
      %s601 = sadd.s32 %s599, %s600
      %s602 = smul.addr %s601, 4
      %s603 = scalar_lea.vmem %s1, %s602
      %p604 = pneg %p93
      %p605 = pneg %p90
      %p606 = scmp.lt.s32.totalorder %s34, 1
      %s607 = scalar_select %p606, %s34, 1
      %s608 = smul.addr %s607, 4
      %s609 = scalar_lea.vmem %s2, %s608
      %p610 = pneg %p119
      %p611 = pneg %p116
      %p612 = pneg %p140
      %p613 = pneg %p137
      %p614 = pneg %p161
      %p615 = pneg %p158
      %p616 = pneg %p182
      %p617 = pneg %p179
      %p618 = pneg %p203
      %p619 = pneg %p200
      %p620 = pneg %p224
      %p621 = pneg %p221
      %p622 = pneg %p245
      %p623 = pneg %p242
      %p624 = pneg %p266
      %p625 = pneg %p263
      %p626 = pneg %p287
      %p627 = pneg %p284
      %p628 = pneg %p308
      %p629 = pneg %p305
      %p630 = pneg %p329
      %p631 = pneg %p326
      %p632 = pneg %p350
      %p633 = pneg %p347
      %p634 = pneg %p371
      %p635 = pneg %p368
      %p636 = pneg %p392
      %p637 = pneg %p389
      %p638 = pneg %p413
      %p639 = pneg %p410
      %p640 = pneg %p434
      %p641 = pneg %p431
      %p642 = pneg %p455
      %p643 = pneg %p452
      %p644 = pneg %p483
      %p645 = pneg %p480
      %p646 = scmp.lt.s32.totalorder %s34, 1
      %s647 = scalar_select %p646, %s34, 1
      %p648 = scmp.lt.s32.totalorder %s35, 1
      %s649 = scalar_select %p648, %s35, 1
      %s650 = smul.addr %s647, 2
      %s651 = sadd.s32 %s649, %s650
      %s652 = smul.addr %s651, 4
      %s653 = scalar_lea.vmem %s19, %s652
      %p654 = scmp.lt.s32.totalorder %s34, 1
      %s655 = scalar_select %p654, %s34, 1
      %p656 = scmp.lt.s32.totalorder %s35, 1
      %s657 = scalar_select %p656, %s35, 1
      %s658 = smul.addr %s655, 2
      %s659 = sadd.s32 %s657, %s658
      %s660 = smul.addr %s659, 4
      %s661 = scalar_lea.vmem %s0, %s660
      %p662 = scmp.lt.s32.totalorder %s34, 1
      %s663 = scalar_select %p662, %s34, 1
      %p664 = scmp.lt.s32.totalorder %s35, 1
      %s665 = scalar_select %p664, %s35, 1
      %s666 = smul.addr %s663, 2
      %s667 = sadd.s32 %s665, %s666
      %s668 = smul.addr %s667, 4
      %s669 = scalar_lea.vmem %s1, %s668
      %p670 = scmp.lt.s32.totalorder %s34, 1
      %s671 = scalar_select %p670, %s34, 1
      %s672 = smul.addr %s671, 4
      %s673 = scalar_lea.vmem %s2, %s672
      %p674 = scmp.lt.s32.totalorder %s34, 1
      %s675 = scalar_select %p674, %s34, 1
      %p676 = scmp.lt.s32.totalorder %s35, 1
      %s677 = scalar_select %p676, %s35, 1
      %s678 = smul.addr %s675, 2
      %s679 = sadd.s32 %s677, %s678
      %s680 = smul.addr %s679, 4
      %s681 = scalar_lea.vmem %s19, %s680
      %v683 = vld [vmem:[%s661] sm:$0xf]
      %v684 = vld [vmem:[%s669] sm:$0xf]
      %v685 = vld [vmem:[%s3] sm:$0xf]
      %v686 = vld [vmem:[%s4] sm:$0xf]
      %v687 = vld [vmem:[%s5] sm:$0xf]
      %v688 = vld [vmem:[%s6] sm:$0xff]
      %v689 = vld [vmem:[%s7] sm:$0xff]
      %v690 = vld [vmem:[%s8] sm:$0xff]
      %692 = vrot.lane.b32.xlu0 %v683, 16
      %v693 = vpop.permute.xlu0 %692
      %vm695 = vcmask 130048
      %v696 = vsel %vm695, %v684, %v693
      %v697 = vsel %vm695, %v693, %v684
      %vm698 = vcmask 1043456
      %v699 = vsel %vm698, %v696, 0.0
      %v700 = vrot.slane %v699, 4
      %v701 = vadd.f32 %v699, %v700
      %v702 = vrot.slane %v701, 2
      %v703 = vadd.f32 %v701, %v702
      %v704 = vrot.slane %v703, 1
      %v705 = vadd.f32 %v703, %v704
      %vm706 = vcmask 257024
      %v707 = vsel %vm706, %v697, 0.0
      %v708 = vrot.slane %v707, 4
      %v709 = vadd.f32 %v707, %v708
      %v710 = vrot.slane %v709, 2
      %v711 = vadd.f32 %v709, %v710
      %v712 = vrot.slane %v711, 1
      %v713 = vadd.f32 %v711, %v712
      %v714 = vrcp.pop 4.0
      %v715 = vmul.f32 %v705, %v714
      %v716 = vmul.f32 %v713, %v714
      %v717 = vsub.f32 %v696, %v715
      %v718 = vsub.f32 %v697, %v716
      %v719 = vmul.f32 %v717, %v717
      %v720 = vmul.f32 %v718, %v718
      %v721 = vsel %vm698, %v719, 0.0
      %v722 = vrot.slane %v721, 4
      %v723 = vadd.f32 %v721, %v722
      %v724 = vrot.slane %v723, 2
      %v725 = vadd.f32 %v723, %v724
      %v726 = vrot.slane %v725, 1
      %v727 = vadd.f32 %v725, %v726
      %v728 = vsel %vm706, %v720, 0.0
      %v729 = vrot.slane %v728, 4
      %v730 = vadd.f32 %v728, %v729
      %v731 = vrot.slane %v730, 2
      %v732 = vadd.f32 %v730, %v731
      %v733 = vrot.slane %v732, 1
      %v734 = vadd.f32 %v732, %v733
      %v735 = vmul.f32 %v727, %v714
      %v736 = vmul.f32 %v734, %v714
      %v737 = vadd.f32 %v735, 1e-06
      %v738 = vadd.f32 %v736, 1e-06
      %v739 = vrsqrt.pop %v737
      %v740 = vrsqrt.pop %v738
      %v741 = vmul.f32 %v717, %v739
      %v742 = vmul.f32 %v718, %v740
      %744 = vset.pattern.permute.xlu0 0
      %745 = vperm.xlu0 %744, %v685
      %v746 = vpop.permute.xlu0 %745
      %v748 = vmul.f32 %v741, %v746
      %v749 = vmul.f32 %v742, %v746
      %751 = vset.pattern.permute.xlu0 0
      %752 = vperm.xlu0 %751, %v686
      %v753 = vpop.permute.xlu0 %752
      %v755 = vadd.f32 %v748, %v753
      %v756 = vadd.f32 %v749, %v753
      %v757 = vpack.c.bf16 %v755, %v755
      %v758 = vpack.c.bf16 %v756, %v756
      %760 = vset.pattern.permute.xlu0 0
      %761 = vperm.xlu0 %760, %v688
      %v762 = vpop.permute.xlu0 %761
      %vm764 = vcmask 31744
      %v766 = vsel %vm764, %v687, 0
      %vm768 = vcmask 1041408
      %v770 = vsel %vm768, %v757, 0
      %v773 = vsel %vm768, %v758, 0
      %775 = vmatprep.subr.bf16.mxu0 %v773
      %776 = vmatpush1.bf16.msra.mxu0 %v770
      %777 = vmatprep.subr.bf16.mxu0 0
      %778 = vmatpush1.bf16.msra.mxu0 0
      %779 = vmatprep.subr.bf16.mxu0 0
      %780 = vmatpush1.bf16.msra.mxu0 0
      %781 = vmatprep.subr.bf16.mxu0 0
      %782 = vmatpush1.bf16.msra.mxu0 0
      %783 = vmatprep.subr.bf16.mxu0 0
      %784 = vmatpush1.bf16.msra.mxu0 0
      %785 = vmatprep.subr.bf16.mxu0 0
      %786 = vmatpush1.bf16.msra.mxu0 0
      %787 = vmatprep.subr.bf16.mxu0 0
      %788 = vmatpush1.bf16.msra.mxu0 0
      %789 = vmatprep.subr.bf16.mxu0 0
      %790 = vmatpush1.bf16.msra.mxu0 0
      %791 = vmatprep.subr.bf16.mxu0 0
      %792 = vmatpush1.bf16.msra.mxu0 0
      %793 = vmatprep.subr.bf16.mxu0 0
      %794 = vmatpush1.bf16.msra.mxu0 0
      %795 = vmatprep.subr.bf16.mxu0 0
      %796 = vmatpush1.bf16.msra.mxu0 0
      %797 = vmatprep.subr.bf16.mxu0 0
      %798 = vmatpush1.bf16.msra.mxu0 0
      %799 = vmatprep.subr.bf16.mxu0 0
      %800 = vmatpush1.bf16.msra.mxu0 0
      %801 = vmatprep.subr.bf16.mxu0 0
      %802 = vmatpush1.bf16.msra.mxu0 0
      %803 = vmatprep.subr.bf16.mxu0 0
      %804 = vmatpush1.bf16.msra.mxu0 0
      %805 = vmatprep.subr.bf16.mxu0 0
      %806 = vmatpush1.bf16.msra.mxu0 0
      %807 = vmatprep.mubr.bf16.mxu0 0
      %808 = vmatmul.mubr.bf16.gmra.mrb[0].mxu0 %v766
      %v809 = vpop.f32.mrb[0].mxu0
      %v810 = vadd.f32 %v762, %v809
      %v811 = vpop.f32.mrb[0].mxu0
      %v812 = vadd.f32 %v762, %v811
      %v813 = vpop.f32.mrb[0].mxu0
      %v814 = vpop.f32.mrb[0].mxu0
      %815 = vdwg.mxu0
      %v816 = vlaneseq
      %v817 = vand.u32 %v816, 127
      %v818 = vadd.s32 %v817, 128
      %vm819 = vcmp.ge.s32.totalorder %v817, 16
      %vm820 = vcmp.ge.s32.totalorder %v818, 16
      %p821 = scmp.gt.s32.totalorder %s35, 0
      %s822 = scalar_select %p821, 1, 0
      %v823 = vstv %s822
      %vm824 = vcmp.eq.s32.totalorder %v823, 1
      %vm825 = vmor %vm819, %vm824
      %vm826 = vmor %vm820, %vm824
      %vm827 = vcmp.lt.s32.totalorder %v817, 144
      %vm828 = vcmp.lt.s32.totalorder %v818, 144
      %p829 = scmp.lt.s32.totalorder %s35, 1
      %s830 = scalar_select %p829, 1, 0
      %v831 = vstv %s830
      %vm832 = vcmp.eq.s32.totalorder %v831, 1
      %vm833 = vmor %vm827, %vm832
      %vm834 = vmor %vm828, %vm832
      %vm835 = vmand %vm825, %vm833
      %vm836 = vmand %vm826, %vm834
      %v837 = vsel %vm835, 1, 0
      %v838 = vsel %vm836, 1, 0
      %vm839 = vcmp.eq.s32.totalorder %v837, 1
      %vm840 = vcmp.eq.s32.totalorder %v838, 1
      %v841 = vsel %vm839, %v810, 0.0
      %v842 = vsel %vm840, %v812, 0.0
      %845 = vrot.lane.b32.xlu0 %v841, 1
      %v846 = vpop.permute.xlu0 %845
      %847 = vrot.lane.b32.xlu0 %v842, 1
      %v848 = vpop.permute.xlu0 %847
      %vm849 = vcmask 7168
      %v850 = vsel %vm849, %v846, %v848
      %v853 = vsel %vm849, 0.0, %v846
      %854 = vrot.lane.b32.xlu0 %v841, 127
      %v855 = vpop.permute.xlu0 %854
      %856 = vrot.lane.b32.xlu0 %v842, 127
      %v857 = vpop.permute.xlu0 %856
      %vm858 = vcmask 1039360
      %v859 = vsel %vm858, %v855, %v857
      %vm862 = vcmask 252928
      %v863 = vsel %vm862, %v857, 0.0
      %865 = vset.pattern.permute.xlu0 0
      %866 = vperm.xlu0 %865, %v689
      %v867 = vpop.permute.xlu0 %866
      %v869 = vmul.f32 %v853, %v867
      %v870 = vadd.f32 %v869, 0.0
      %871 = vset.pattern.permute.xlu0 1
      %872 = vperm.xlu0 %871, %v689
      %v873 = vpop.permute.xlu0 %872
      %v875 = vmul.f32 %v841, %v873
      %v876 = vadd.f32 %v875, 0.0
      %877 = vset.pattern.permute.xlu0 2
      %878 = vperm.xlu0 %877, %v689
      %v879 = vpop.permute.xlu0 %878
      %v881 = vmul.f32 %v859, %v879
      %v882 = vadd.f32 %v881, 0.0
      %883 = vset.pattern.permute.xlu0 3
      %884 = vperm.xlu0 %883, %v689
      %v885 = vpop.permute.xlu0 %884
      %v887 = vmul.f32 %v853, %v885
      %v888 = vmul.f32 %v850, %v885
      %891 = vrot.lane.b32.xlu0 %v887, 112
      %v892 = vpop.permute.xlu0 %891
      %893 = vrot.lane.b32.xlu0 %v888, 112
      %v894 = vpop.permute.xlu0 %893
      %vm895 = vcmask 916480
      %v896 = vsel %vm895, %v892, %v894
      %v898 = vadd.f32 %v870, %v896
      %899 = vset.pattern.permute.xlu0 4
      %900 = vperm.xlu0 %899, %v689
      %v901 = vpop.permute.xlu0 %900
      %v903 = vmul.f32 %v841, %v901
      %v904 = vmul.f32 %v842, %v901
      %907 = vrot.lane.b32.xlu0 %v903, 112
      %v908 = vpop.permute.xlu0 %907
      %909 = vrot.lane.b32.xlu0 %v904, 112
      %v910 = vpop.permute.xlu0 %909
      %v911 = vsel %vm895, %v908, %v910
      %v913 = vadd.f32 %v876, %v911
      %914 = vset.pattern.permute.xlu0 5
      %915 = vperm.xlu0 %914, %v689
      %v916 = vpop.permute.xlu0 %915
      %v918 = vmul.f32 %v859, %v916
      %v919 = vmul.f32 %v863, %v916
      %922 = vrot.lane.b32.xlu0 %v918, 112
      %v923 = vpop.permute.xlu0 %922
      %924 = vrot.lane.b32.xlu0 %v919, 112
      %v925 = vpop.permute.xlu0 %924
      %v926 = vsel %vm895, %v923, %v925
      %v928 = vadd.f32 %v882, %v926
      %929 = vset.pattern.permute.xlu0 6
      %930 = vperm.xlu0 %929, %v689
      %v931 = vpop.permute.xlu0 %930
      %v933 = vmul.f32 %v853, %v931
      %v934 = vmul.f32 %v850, %v931
      %937 = vrot.lane.b32.xlu0 %v933, 96
      %v938 = vpop.permute.xlu0 %937
      %939 = vrot.lane.b32.xlu0 %v934, 96
      %v940 = vpop.permute.xlu0 %939
      %vm941 = vcmask 785408
      %v942 = vsel %vm941, %v938, %v940
      %v944 = vadd.f32 %v898, %v942
      %945 = vset.pattern.permute.xlu0 7
      %946 = vperm.xlu0 %945, %v689
      %v947 = vpop.permute.xlu0 %946
      %v949 = vmul.f32 %v841, %v947
      %v950 = vmul.f32 %v842, %v947
      %953 = vrot.lane.b32.xlu0 %v949, 96
      %v954 = vpop.permute.xlu0 %953
      %955 = vrot.lane.b32.xlu0 %v950, 96
      %v956 = vpop.permute.xlu0 %955
      %v957 = vsel %vm941, %v954, %v956
      %v959 = vadd.f32 %v913, %v957
      %960 = vset.pattern.permute.xlu0 8
      %961 = vperm.xlu0 %960, %v689
      %v962 = vpop.permute.xlu0 %961
      %v964 = vmul.f32 %v859, %v962
      %v965 = vmul.f32 %v863, %v962
      %968 = vrot.lane.b32.xlu0 %v964, 96
      %v969 = vpop.permute.xlu0 %968
      %970 = vrot.lane.b32.xlu0 %v965, 96
      %v971 = vpop.permute.xlu0 %970
      %v972 = vsel %vm941, %v969, %v971
      %v974 = vadd.f32 %v928, %v972
      %vm975 = vcmp.lt.s32.totalorder %v817, 0
      %v976 = vsub.s32 0, %v817
      %v977 = vsel %vm975, %v976, %v817
      %v978 = vshrl.u32 %v977, 4
      %v979 = vand.u32 %v977, 15
      %v980 = vsub.s32 0, %v979
      %v981 = vsel %vm975, %v980, %v979
      %vm982 = vcmp.ne.s32.totalorder %v981, 0
      %vm983 = vcmp.lt.s32.totalorder %v981, 0
      %vm984 = vmand %vm983, %vm982
      %v985 = vadd.s32 %v981, 16
      %v986 = vsel %vm984, %v985, %v981
      %vm987 = vcmp.ne.s32.totalorder %v986, 0
      %v988 = vsel %vm987, 1, 0
      %vm989 = vcmp.eq.s32.totalorder %v988, 1
      %v990 = vsel %vm989, %v944, 0.0
      %v991 = vadd.f32 %v990, %v959
      %vm992 = vcmp.ne.s32.totalorder %v986, 15
      %v993 = vsel %vm992, 1, 0
      %vm994 = vcmp.eq.s32.totalorder %v993, 1
      %v995 = vsel %vm994, %v974, 0.0
      %v996 = vadd.f32 %v991, %v995
      %998 = vset.pattern.permute.xlu0 0
      %999 = vperm.xlu0 %998, %v690
      %v1000 = vpop.permute.xlu0 %999
      %v1002 = vadd.f32 %v996, %v1000
      %v1004 = vrot.slane %v1002, 4
      %v1006 = vmul.f32 %v1002, %v1004
      %v1007 = vld [vmem:[%s673] sm:$0xf]
      %1009 = vset.pattern.permute.xlu0 0
      %1010 = vperm.xlu0 %1009, %v1007
      %v1011 = vpop.permute.xlu0 %1010
      %v1013 = vmul.f32 %v1006, %v1011
      %v1014 = vld [vmem:[%s9] sm:$0x3]
      %v1015 = vpack.c.bf16 %v1013, %v1013
      %v1016 = vld [vmem:[%s10] sm:$0xf]
      %1018 = vset.pattern.permute.xlu0 0
      %1019 = vperm.xlu0 %1018, %v1016
      %v1020 = vpop.permute.xlu0 %1019
      %v1023 = vsel %vm764, %v1014, 0
      %v1026 = vsel %vm768, %v1015, 0
      %1028 = vmatprep.subr.bf16.mxu0 0
      %1029 = vmatpush1.bf16.msra.mxu0 %v1026
      %1030 = vmatprep.subr.bf16.mxu0 0
      %1031 = vmatpush1.bf16.msra.mxu0 0
      %1032 = vmatprep.subr.bf16.mxu0 0
      %1033 = vmatpush1.bf16.msra.mxu0 0
      %1034 = vmatprep.subr.bf16.mxu0 0
      %1035 = vmatpush1.bf16.msra.mxu0 0
      %1036 = vmatprep.subr.bf16.mxu0 0
      %1037 = vmatpush1.bf16.msra.mxu0 0
      %1038 = vmatprep.subr.bf16.mxu0 0
      %1039 = vmatpush1.bf16.msra.mxu0 0
      %1040 = vmatprep.subr.bf16.mxu0 0
      %1041 = vmatpush1.bf16.msra.mxu0 0
      %1042 = vmatprep.subr.bf16.mxu0 0
      %1043 = vmatpush1.bf16.msra.mxu0 0
      %1044 = vmatprep.subr.bf16.mxu0 0
      %1045 = vmatpush1.bf16.msra.mxu0 0
      %1046 = vmatprep.subr.bf16.mxu0 0
      %1047 = vmatpush1.bf16.msra.mxu0 0
      %1048 = vmatprep.subr.bf16.mxu0 0
      %1049 = vmatpush1.bf16.msra.mxu0 0
      %1050 = vmatprep.subr.bf16.mxu0 0
      %1051 = vmatpush1.bf16.msra.mxu0 0
      %1052 = vmatprep.subr.bf16.mxu0 0
      %1053 = vmatpush1.bf16.msra.mxu0 0
      %1054 = vmatprep.subr.bf16.mxu0 0
      %1055 = vmatpush1.bf16.msra.mxu0 0
      %1056 = vmatprep.subr.bf16.mxu0 0
      %1057 = vmatpush1.bf16.msra.mxu0 0
      %1058 = vmatprep.subr.bf16.mxu0 0
      %1059 = vmatpush1.bf16.msra.mxu0 0
      %1060 = vmatprep.mubr.bf16.mxu0 0
      %1061 = vmatmul.mubr.bf16.gmra.mrb[0].mxu0 %v1023
      %v1062 = vpop.f32.mrb[0].mxu0
      %v1063 = vadd.f32 %v1020, %v1062
      %v1064 = vpop.f32.mrb[0].mxu0
      %v1065 = vpop.f32.mrb[0].mxu0
      %v1066 = vpop.f32.mrb[0].mxu0
      %1067 = vdwg.mxu0
      %v1068 = vld [vmem:[%s11] sm:$0xf]
      %1070 = vset.pattern.permute.xlu0 0
      %1071 = vperm.xlu0 %1070, %v1068
      %v1072 = vpop.permute.xlu0 %1071
      %v1074 = vmul.f32 %v1063, %v1072
      %v1075 = vadd.f32 %v1074, %v683
      %v1076 = vsel %vm698, %v1075, 0.0
      %v1077 = vrot.slane %v1076, 4
      %v1078 = vadd.f32 %v1076, %v1077
      %v1079 = vrot.slane %v1078, 2
      %v1080 = vadd.f32 %v1078, %v1079
      %v1081 = vrot.slane %v1080, 1
      %v1082 = vadd.f32 %v1080, %v1081
      %v1083 = vmul.f32 %v1082, %v714
      %v1084 = vsub.f32 %v1075, %v1083
      %v1085 = vmul.f32 %v1084, %v1084
      %v1086 = vsel %vm698, %v1085, 0.0
      %v1087 = vrot.slane %v1086, 4
      %v1088 = vadd.f32 %v1086, %v1087
      %v1089 = vrot.slane %v1088, 2
      %v1090 = vadd.f32 %v1088, %v1089
      %v1091 = vrot.slane %v1090, 1
      %v1092 = vadd.f32 %v1090, %v1091
      %v1093 = vmul.f32 %v1092, %v714
      %v1094 = vadd.f32 %v1093, 1e-06
      %v1095 = vrsqrt.pop %v1094
      %v1096 = vmul.f32 %v1084, %v1095
      %v1097 = vld [vmem:[%s12] sm:$0xf]
      %1099 = vset.pattern.permute.xlu0 0
      %1100 = vperm.xlu0 %1099, %v1097
      %v1101 = vpop.permute.xlu0 %1100
      %v1103 = vmul.f32 %v1096, %v1101
      %v1104 = vld [vmem:[%s13] sm:$0xf]
      %1106 = vset.pattern.permute.xlu0 0
      %1107 = vperm.xlu0 %1106, %v1104
      %v1108 = vpop.permute.xlu0 %1107
      %v1110 = vadd.f32 %v1103, %v1108
      %v1111 = vpack.c.bf16 %v1110, %v1110
      %v1112 = vld [vmem:[%s14] sm:$0xf]
      %v1113 = vld [vmem:[%s15] sm:$0xff]
      %1115 = vset.pattern.permute.xlu0 0
      %1116 = vperm.xlu0 %1115, %v1113
      %v1117 = vpop.permute.xlu0 %1116
      %v1120 = vsel %vm764, %v1112, 0
      %v1123 = vsel %vm768, %v1111, 0
      %1125 = vmatprep.subr.bf16.mxu0 0
      %1126 = vmatpush1.bf16.msra.mxu0 %v1123
      %1127 = vmatprep.subr.bf16.mxu0 0
      %1128 = vmatpush1.bf16.msra.mxu0 0
      %1129 = vmatprep.subr.bf16.mxu0 0
      %1130 = vmatpush1.bf16.msra.mxu0 0
      %1131 = vmatprep.subr.bf16.mxu0 0
      %1132 = vmatpush1.bf16.msra.mxu0 0
      %1133 = vmatprep.subr.bf16.mxu0 0
      %1134 = vmatpush1.bf16.msra.mxu0 0
      %1135 = vmatprep.subr.bf16.mxu0 0
      %1136 = vmatpush1.bf16.msra.mxu0 0
      %1137 = vmatprep.subr.bf16.mxu0 0
      %1138 = vmatpush1.bf16.msra.mxu0 0
      %1139 = vmatprep.subr.bf16.mxu0 0
      %1140 = vmatpush1.bf16.msra.mxu0 0
      %1141 = vmatprep.subr.bf16.mxu0 0
      %1142 = vmatpush1.bf16.msra.mxu0 0
      %1143 = vmatprep.subr.bf16.mxu0 0
      %1144 = vmatpush1.bf16.msra.mxu0 0
      %1145 = vmatprep.subr.bf16.mxu0 0
      %1146 = vmatpush1.bf16.msra.mxu0 0
      %1147 = vmatprep.subr.bf16.mxu0 0
      %1148 = vmatpush1.bf16.msra.mxu0 0
      %1149 = vmatprep.subr.bf16.mxu0 0
      %1150 = vmatpush1.bf16.msra.mxu0 0
      %1151 = vmatprep.subr.bf16.mxu0 0
      %1152 = vmatpush1.bf16.msra.mxu0 0
      %1153 = vmatprep.subr.bf16.mxu0 0
      %1154 = vmatpush1.bf16.msra.mxu0 0
      %1155 = vmatprep.subr.bf16.mxu0 0
      %1156 = vmatpush1.bf16.msra.mxu0 0
      %1157 = vmatprep.mubr.bf16.mxu0 0
      %1158 = vmatmul.mubr.bf16.gmra.mrb[0].mxu0 %v1120
      %v1159 = vpop.f32.mrb[0].mxu0
      %v1160 = vadd.f32 %v1117, %v1159
      %v1161 = vpop.f32.mrb[0].mxu0
      %v1162 = vpop.f32.mrb[0].mxu0
      %v1163 = vpop.f32.mrb[0].mxu0
      %1164 = vdwg.mxu0
      %v1166 = vrot.slane %v1160, 4
      %v1168 = vmul.f32 %v1160, %v1166
      %v1169 = vld [vmem:[%s16] sm:$0x3]
      %v1170 = vpack.c.bf16 %v1168, %v1168
      %v1171 = vld [vmem:[%s17] sm:$0xf]
      %1173 = vset.pattern.permute.xlu0 0
      %1174 = vperm.xlu0 %1173, %v1171
      %v1175 = vpop.permute.xlu0 %1174
      %v1178 = vsel %vm764, %v1169, 0
      %v1181 = vsel %vm768, %v1170, 0
      %1183 = vmatprep.subr.bf16.mxu0 0
      %1184 = vmatpush1.bf16.msra.mxu0 %v1181
      %1185 = vmatprep.subr.bf16.mxu0 0
      %1186 = vmatpush1.bf16.msra.mxu0 0
      %1187 = vmatprep.subr.bf16.mxu0 0
      %1188 = vmatpush1.bf16.msra.mxu0 0
      %1189 = vmatprep.subr.bf16.mxu0 0
      %1190 = vmatpush1.bf16.msra.mxu0 0
      %1191 = vmatprep.subr.bf16.mxu0 0
      %1192 = vmatpush1.bf16.msra.mxu0 0
      %1193 = vmatprep.subr.bf16.mxu0 0
      %1194 = vmatpush1.bf16.msra.mxu0 0
      %1195 = vmatprep.subr.bf16.mxu0 0
      %1196 = vmatpush1.bf16.msra.mxu0 0
      %1197 = vmatprep.subr.bf16.mxu0 0
      %1198 = vmatpush1.bf16.msra.mxu0 0
      %1199 = vmatprep.subr.bf16.mxu0 0
      %1200 = vmatpush1.bf16.msra.mxu0 0
      %1201 = vmatprep.subr.bf16.mxu0 0
      %1202 = vmatpush1.bf16.msra.mxu0 0
      %1203 = vmatprep.subr.bf16.mxu0 0
      %1204 = vmatpush1.bf16.msra.mxu0 0
      %1205 = vmatprep.subr.bf16.mxu0 0
      %1206 = vmatpush1.bf16.msra.mxu0 0
      %1207 = vmatprep.subr.bf16.mxu0 0
      %1208 = vmatpush1.bf16.msra.mxu0 0
      %1209 = vmatprep.subr.bf16.mxu0 0
      %1210 = vmatpush1.bf16.msra.mxu0 0
      %1211 = vmatprep.subr.bf16.mxu0 0
      %1212 = vmatpush1.bf16.msra.mxu0 0
      %1213 = vmatprep.subr.bf16.mxu0 0
      %1214 = vmatpush1.bf16.msra.mxu0 0
      %1215 = vmatprep.mubr.bf16.mxu0 0
      %1216 = vmatmul.mubr.bf16.gmra.mrb[0].mxu0 %v1178
      %v1217 = vpop.f32.mrb[0].mxu0
      %v1218 = vadd.f32 %v1175, %v1217
      %v1219 = vpop.f32.mrb[0].mxu0
      %v1220 = vpop.f32.mrb[0].mxu0
      %v1221 = vpop.f32.mrb[0].mxu0
      %1222 = vdwg.mxu0
      %v1223 = vld [vmem:[%s18] sm:$0xf]
      %1225 = vset.pattern.permute.xlu0 0
      %1226 = vperm.xlu0 %1225, %v1223
      %v1227 = vpop.permute.xlu0 %1226
      %v1229 = vmul.f32 %v1218, %v1227
      %v1230 = vadd.f32 %v1229, %v1075
      %1231 = vst [vmem:[%s681] sm:$0xf] %v1230
      %p1232 = scmp.lt.s32.totalorder %s34, 1
      %s1233 = scalar_select %p1232, %s34, 1
      %p1234 = scmp.lt.s32.totalorder %s35, 1
      %s1235 = scalar_select %p1234, %s35, 1
      %s1236 = smul.addr %s1233, 2
      %s1237 = sadd.s32 %s1235, %s1236
      %s1238 = smul.addr %s1237, 4
      %s1239 = scalar_lea.vmem %s19, %s1238
      // Predicated region
      $region97: #{nafnet_block.3} parent=95 // pred_check
        %p1240 = pneg %p480
      $region98: #{nafnet_block.3} parent=95 // pred_check_branch
        %1242 = sbr.rel (%p1240) target = $region100
      $region99: #{nafnet_block.3} parent=95 // pred_region
        _
      $region100: #{nafnet_block.3} parent=95 // pred_fallthru
        _
    $region96: #{nafnet_block.3} parent=5 // pred_fallthru
      _
    %p1243 = scmp.le.s32.totalorder 2, %s25
    // Predicated region
    $region101: #{nafnet_block.3} parent=5 // pred_check
      %p1244 = pneg %p1243
    $region102: #{nafnet_block.3} parent=5 // pred_check_branch
      %1246 = sbr.rel (%p1244) target = $region104
    $region103: #{nafnet_block.3} parent=5 // pred_region
      %s1247 = ssub.s32 %s25, 2
      // Predicated region
      $region105: #{nafnet_block.3} parent=103 // pred_check
        %p1248 = pneg %p486
      $region106: #{nafnet_block.3} parent=103 // pred_check_branch
        %1250 = sbr.rel (%p1248) target = $region108
      $region107: #{nafnet_block.3} parent=103 // pred_region
        %p1251 = scmp.lt.s32.totalorder %s36, 1
        %s1252 = scalar_select %p1251, %s36, 1
        %p1253 = scmp.lt.s32.totalorder %s37, 1
        %s1254 = scalar_select %p1253, %s37, 1
        %s1255 = smul.addr %s1252, 2
        %s1256 = sadd.s32 %s1254, %s1255
        %s1257 = smul.addr %s1256, 4
        %s1258 = scalar_lea.vmem %s19, %s1257
      $region108: #{nafnet_block.3} parent=103 // pred_fallthru
        _
    $region104: #{nafnet_block.3} parent=5 // pred_fallthru
      _
  $region6: #{nafnet_block.3} parent=0 // loop_footer
    %s29 = sadd.s32 1, %s25
  $region7: #{nafnet_block.3} parent=0 // loop_footer_branch
    %24 = sbr.rel target = $region3
  $region8: #{nafnet_block.3} parent=0 // loop_exit
    _

</llo_original>
